<compile_context>
chip_gen: v7x
topology: tpu7x:2x2x1
jax: 0.10.0
libtpu: 0.0.40
codegen_flags: <defaults>
</compile_context>

<pallas_src>
import functools

import jax
import jax.numpy as jnp
from jax.experimental import pallas as pl
from jax.experimental.pallas import tpu as pltpu

SUBLANES = 8  # f32 sublane count of a vreg


def rnn_kernel(x_ref,          # (T*Bp, I)  time-major, batch-padded input
               wih0_ref,       # (I, H)     layer-0 input weight (transposed)
               whh0_ref,       # (H, H)     layer-0 hidden weight (transposed)
               b0_ref,         # (1, H)     folded layer-0 bias
               wih1_ref,       # (H, H)     layer-1 input weight (transposed)
               whh1_ref,       # (H, H)     layer-1 hidden weight (transposed)
               b1_ref,         # (1, H)     folded layer-1 bias
               wfc_ref,        # (H, O)     fc weight (transposed)
               bfc_ref,        # (1, O)     fc bias
               o_ref,          # (Bp, O)    output (padded rows sliced off by caller)
               *, batch_padded, seq_len):
    Bp, T = batch_padded, seq_len
    H = whh0_ref.shape[0]

    # --- Prologue: layer-0 input projection for ALL timesteps at once -----
    pre0_all = (jnp.dot(x_ref[...], wih0_ref[...],
                        preferred_element_type=jnp.float32)
                + b0_ref[...])                                   # (T*Bp, H)

    # Hoist the bias broadcast out of the loop (JAX does not CSE it).
    b1 = jnp.broadcast_to(b1_ref[...], (Bp, H))                  # (Bp, H)

    # --- Peeled t = 0: h0, h1 start at zero -> no recurrent matmuls -------
    h0 = jnp.tanh(pre0_all[0:Bp, :])
    h1 = jnp.tanh(jnp.dot(h0, wih1_ref[...],
                          preferred_element_type=jnp.float32) + b1)

    # --- Unrolled recurrence t = 1 .. T-1 ----------------------------------
    # Weights are read from their VMEM refs at the use site (keeping them
    # live as values across the unrolled loop would spill).
    for t in range(1, T):
        pre0_t = pre0_all[t * Bp:(t + 1) * Bp, :]                # aligned (Bp, H)
        # Layer-1 hidden partial: only depends on h1_{t-1}; issue it early so
        # it overlaps the serial layer-0 chain.
        r1 = jnp.dot(h1, whh1_ref[...], preferred_element_type=jnp.float32)
        # Layer 0: h0_t = tanh(pre0_t + h0_{t-1} @ Whh0^T)
        h0 = jnp.tanh(pre0_t + jnp.dot(h0, whh0_ref[...],
                                       preferred_element_type=jnp.float32))
        # Layer 1: h1_t = tanh(h0_t @ Wih1^T + h1_{t-1} @ Whh1^T + b1)
        h1 = jnp.tanh(jnp.dot(h0, wih1_ref[...],
                              preferred_element_type=jnp.float32) + r1 + b1)

    # --- Epilogue: relu(out)[:, -1, :] -> fc -> sigmoid ---------------------
    relu_out = jnp.maximum(h1, 0.0)
    logits = (jnp.dot(relu_out, wfc_ref[...],
                      preferred_element_type=jnp.float32)
              + bfc_ref[...])
    o_ref[...] = jax.nn.sigmoid(logits)


def prepare_params(params):
    """One-time parameter prep (transposes / bias folds).

    Do this ONCE and reuse the result; it is deliberately kept OUT of the
    per-call jit so the (128,128) transposes don't sit in front of the
    kernel on every invocation.
    """
    H = params["whh0"].shape[0]
    O = params["wfc"].shape[0]
    return {
        "wih0_t": jnp.asarray(params["wih0"].T, jnp.float32),        # (I, H)
        "whh0_t": jnp.asarray(params["whh0"].T, jnp.float32),        # (H, H)
        "wih1_t": jnp.asarray(params["wih1"].T, jnp.float32),        # (H, H)
        "whh1_t": jnp.asarray(params["whh1"].T, jnp.float32),        # (H, H)
        "b0": (params["bih0"] + params["bhh0"]).reshape(1, H).astype(jnp.float32),
        "b1": (params["bih1"] + params["bhh1"]).reshape(1, H).astype(jnp.float32),
        "wfc_t": jnp.asarray(params["wfc"].T, jnp.float32),           # (H, O)
        "bfc": params["bfc"].reshape(1, O).astype(jnp.float32),       # (1, O)
    }


@jax.jit
def rnn_forward(x, prepared):
    """x: (B, T, I) float32, batch-first like PyTorch nn.RNN(batch_first=True)."""
    B, T, I = x.shape
    H = prepared["whh0_t"].shape[0]
    O = prepared["wfc_t"].shape[1]
    Bp = pl.cdiv(B, SUBLANES) * SUBLANES                          # pad batch to 8

    # Time-major, batch padded: row index = t*Bp + b. Every per-step slice in
    # the kernel is then a whole aligned (8, H) vreg slab.
    x_tm = jnp.transpose(x.astype(jnp.float32), (1, 0, 2))        # (T, B, I)
    x_tm = jnp.pad(x_tm, ((0, 0), (0, Bp - B), (0, 0)))           # (T, Bp, I)
    x_tb = x_tm.reshape(T * Bp, I)                                # (T*Bp, I)

    vmem = functools.partial(pl.BlockSpec, memory_space=pltpu.MemorySpace.VMEM)
    kernel = functools.partial(rnn_kernel, batch_padded=Bp, seq_len=T)

    # Advisory cost estimate (prologue + 3 recurrent matmuls per step + fc).
    flops = (2 * T * Bp * I * H
             + 2 * (3 * (T - 1) + 1) * Bp * H * H
             + 2 * Bp * H * O)
    transcendentals = 2 * T * Bp * H + Bp * O
    bytes_accessed = 4 * (T * Bp * I + I * H + 3 * H * H + 2 * H
                          + H * O + O + Bp * O)

    out_p = pl.pallas_call(
        kernel,
        out_shape=jax.ShapeDtypeStruct((Bp, O), jnp.float32),
        in_specs=[vmem()] * 9,        # whole arrays resident in VMEM (~0.3 MiB)
        out_specs=vmem(),
        cost_estimate=pl.CostEstimate(flops=flops,
                                      transcendentals=transcendentals,
                                      bytes_accessed=bytes_accessed),
    )(x_tb,
      prepared["wih0_t"], prepared["whh0_t"], prepared["b0"],
      prepared["wih1_t"], prepared["whh1_t"], prepared["b1"],
      prepared["wfc_t"], prepared["bfc"])

    return out_p[:B, :]               # drop padded batch rows


def init_params(key, input_size, hidden_size, output_size):
    """Deterministic init mimicking PyTorch's U(-1/sqrt(H), 1/sqrt(H))."""
    ks = jax.random.split(key, 11)
    s = 1.0 / jnp.sqrt(hidden_size)
    u = lambda k, shape: jax.random.uniform(k, shape, jnp.float32, -s, s)
    return {
        "wih0": u(ks[0], (hidden_size, input_size)),
        "whh0": u(ks[1], (hidden_size, hidden_size)),
        "bih0": u(ks[2], (hidden_size,)),
        "bhh0": u(ks[3], (hidden_size,)),
        "wih1": u(ks[4], (hidden_size, hidden_size)),
        "whh1": u(ks[5], (hidden_size, hidden_size)),
        "bih1": u(ks[6], (hidden_size,)),
        "bhh1": u(ks[7], (hidden_size,)),
        "wfc":  u(ks[8], (output_size, hidden_size)),
        "bfc":  u(ks[9], (output_size,)),
    }


def rnn_reference(x, params):
    """Pure-JAX reference of the same forward pass (for verification)."""
    x = x.astype(jnp.float32)
    B, T, I = x.shape
    H = params["whh0"].shape[0]
    h0 = jnp.zeros((B, H), jnp.float32)
    h1 = jnp.zeros((B, H), jnp.float32)

    def step(carry, x_t):
        h0, h1 = carry
        h0 = jnp.tanh(x_t @ params["wih0"].T + params["bih0"]
                      + h0 @ params["whh0"].T + params["bhh0"])
        h1 = jnp.tanh(h0 @ params["wih1"].T + params["bih1"]
                      + h1 @ params["whh1"].T + params["bhh1"])
        return (h0, h1), h1

    (_, h1), _ = jax.lax.scan(step, (h0, h1), jnp.transpose(x, (1, 0, 2)))
    out = jnp.maximum(h1, 0.0)                 # relu(out)[:, -1, :]
    out = out @ params["wfc"].T + params["bfc"]
    return jax.nn.sigmoid(out)


if __name__ == "__main__":
    B, T = 2, 8
    input_size, hidden_size, num_layers, output_size = 26, 128, 2, 10

    key = jax.random.PRNGKey(0)
    k_x, k_p = jax.random.split(key)
    x = jax.random.normal(k_x, (B, T, input_size), jnp.float32)
    params = init_params(k_p, input_size, hidden_size, output_size)

    prepared = prepare_params(params)          # one-time weight prep
    prepared = jax.tree_util.tree_map(jax.block_until_ready, prepared)

    out = rnn_forward(x, prepared)
    out = jax.block_until_ready(out)

    ref = rnn_reference(x, params)
    assert out.shape == (B, output_size)
    assert jnp.allclose(out, ref, atol=2e-5, rtol=2e-5), (
        f"max err {jnp.max(jnp.abs(out - ref))}")

    print("KERNEL_OK")
</pallas_src>

<mosaic_0001>
module attributes {stable_mosaic.version = 11 : i64} {
  func.func @rnn_kernel(%arg0: memref<64x26xf32, #tpu.memory_space<vmem>>, %arg1: memref<26x128xf32, #tpu.memory_space<vmem>>, %arg2: memref<128x128xf32, #tpu.memory_space<vmem>>, %arg3: memref<1x128xf32, #tpu.memory_space<vmem>>, %arg4: memref<128x128xf32, #tpu.memory_space<vmem>>, %arg5: memref<128x128xf32, #tpu.memory_space<vmem>>, %arg6: memref<1x128xf32, #tpu.memory_space<vmem>>, %arg7: memref<128x10xf32, #tpu.memory_space<vmem>>, %arg8: memref<1x10xf32, #tpu.memory_space<vmem>>, %arg9: memref<8x10xf32, #tpu.memory_space<vmem>>) attributes {dimension_semantics = [], scalar_prefetch = 0 : i64, scratch_operands = 0 : i64, tpu.core_type = #tpu.core_type<tc>} {
    %c0 = arith.constant 0 : index
    %c0_0 = arith.constant 0 : index
    %0 = vector.load %arg0[%c0, %c0_0] : memref<64x26xf32, #tpu.memory_space<vmem>>, vector<64x26xf32>
    %c0_1 = arith.constant 0 : index
    %c0_2 = arith.constant 0 : index
    %1 = vector.load %arg1[%c0_1, %c0_2] : memref<26x128xf32, #tpu.memory_space<vmem>>, vector<26x128xf32>
    %cst = arith.constant dense<0.000000e+00> : vector<64x128xf32>
    %2 = tpu.matmul %0, %1, %cst {dimension_numbers = #tpu.dot_dimension_numbers<[1], [0], [0], [1], [0, 0, 1, 1], [], []>} : vector<64x26xf32>, vector<26x128xf32>, vector<64x128xf32> -> vector<64x128xf32>
    %c0_3 = arith.constant 0 : index
    %c0_4 = arith.constant 0 : index
    %3 = vector.load %arg3[%c0_3, %c0_4] : memref<1x128xf32, #tpu.memory_space<vmem>>, vector<1x128xf32>
    %4 = vector.broadcast %3 : vector<1x128xf32> to vector<64x128xf32>
    %5 = arith.addf %2, %4 : vector<64x128xf32>
    %c0_5 = arith.constant 0 : index
    %c0_6 = arith.constant 0 : index
    %6 = vector.load %arg6[%c0_5, %c0_6] : memref<1x128xf32, #tpu.memory_space<vmem>>, vector<1x128xf32>
    %7 = vector.shape_cast %6 : vector<1x128xf32> to vector<1x128xf32>
    %8 = vector.broadcast %7 : vector<1x128xf32> to vector<8x128xf32>
    %9 = vector.extract_strided_slice %5 {offsets = [0, 0], sizes = [8, 128], strides = [1, 1]} : vector<64x128xf32> to vector<8x128xf32>
    %10 = math.tanh %9 : vector<8x128xf32>
    %c0_7 = arith.constant 0 : index
    %c0_8 = arith.constant 0 : index
    %11 = vector.load %arg4[%c0_7, %c0_8] : memref<128x128xf32, #tpu.memory_space<vmem>>, vector<128x128xf32>
    %cst_9 = arith.constant dense<0.000000e+00> : vector<8x128xf32>
    %12 = tpu.matmul %10, %11, %cst_9 {dimension_numbers = #tpu.dot_dimension_numbers<[1], [0], [0], [1], [0, 0, 1, 1], [], []>} : vector<8x128xf32>, vector<128x128xf32>, vector<8x128xf32> -> vector<8x128xf32>
    %13 = arith.addf %12, %8 : vector<8x128xf32>
    %14 = math.tanh %13 : vector<8x128xf32>
    %15 = vector.extract_strided_slice %5 {offsets = [8, 0], sizes = [8, 128], strides = [1, 1]} : vector<64x128xf32> to vector<8x128xf32>
    %c0_10 = arith.constant 0 : index
    %c0_11 = arith.constant 0 : index
    %16 = vector.load %arg5[%c0_10, %c0_11] : memref<128x128xf32, #tpu.memory_space<vmem>>, vector<128x128xf32>
    %cst_12 = arith.constant dense<0.000000e+00> : vector<8x128xf32>
    %17 = tpu.matmul %14, %16, %cst_12 {dimension_numbers = #tpu.dot_dimension_numbers<[1], [0], [0], [1], [0, 0, 1, 1], [], []>} : vector<8x128xf32>, vector<128x128xf32>, vector<8x128xf32> -> vector<8x128xf32>
    %c0_13 = arith.constant 0 : index
    %c0_14 = arith.constant 0 : index
    %18 = vector.load %arg2[%c0_13, %c0_14] : memref<128x128xf32, #tpu.memory_space<vmem>>, vector<128x128xf32>
    %cst_15 = arith.constant dense<0.000000e+00> : vector<8x128xf32>
    %19 = tpu.matmul %10, %18, %cst_15 {dimension_numbers = #tpu.dot_dimension_numbers<[1], [0], [0], [1], [0, 0, 1, 1], [], []>} : vector<8x128xf32>, vector<128x128xf32>, vector<8x128xf32> -> vector<8x128xf32>
    %20 = arith.addf %15, %19 : vector<8x128xf32>
    %21 = math.tanh %20 : vector<8x128xf32>
    %c0_16 = arith.constant 0 : index
    %c0_17 = arith.constant 0 : index
    %22 = vector.load %arg4[%c0_16, %c0_17] : memref<128x128xf32, #tpu.memory_space<vmem>>, vector<128x128xf32>
    %cst_18 = arith.constant dense<0.000000e+00> : vector<8x128xf32>
    %23 = tpu.matmul %21, %22, %cst_18 {dimension_numbers = #tpu.dot_dimension_numbers<[1], [0], [0], [1], [0, 0, 1, 1], [], []>} : vector<8x128xf32>, vector<128x128xf32>, vector<8x128xf32> -> vector<8x128xf32>
    %24 = arith.addf %23, %17 : vector<8x128xf32>
    %25 = arith.addf %24, %8 : vector<8x128xf32>
    %26 = math.tanh %25 : vector<8x128xf32>
    %27 = vector.extract_strided_slice %5 {offsets = [16, 0], sizes = [8, 128], strides = [1, 1]} : vector<64x128xf32> to vector<8x128xf32>
    %c0_19 = arith.constant 0 : index
    %c0_20 = arith.constant 0 : index
    %28 = vector.load %arg5[%c0_19, %c0_20] : memref<128x128xf32, #tpu.memory_space<vmem>>, vector<128x128xf32>
    %cst_21 = arith.constant dense<0.000000e+00> : vector<8x128xf32>
    %29 = tpu.matmul %26, %28, %cst_21 {dimension_numbers = #tpu.dot_dimension_numbers<[1], [0], [0], [1], [0, 0, 1, 1], [], []>} : vector<8x128xf32>, vector<128x128xf32>, vector<8x128xf32> -> vector<8x128xf32>
    %c0_22 = arith.constant 0 : index
    %c0_23 = arith.constant 0 : index
    %30 = vector.load %arg2[%c0_22, %c0_23] : memref<128x128xf32, #tpu.memory_space<vmem>>, vector<128x128xf32>
    %cst_24 = arith.constant dense<0.000000e+00> : vector<8x128xf32>
    %31 = tpu.matmul %21, %30, %cst_24 {dimension_numbers = #tpu.dot_dimension_numbers<[1], [0], [0], [1], [0, 0, 1, 1], [], []>} : vector<8x128xf32>, vector<128x128xf32>, vector<8x128xf32> -> vector<8x128xf32>
    %32 = arith.addf %27, %31 : vector<8x128xf32>
    %33 = math.tanh %32 : vector<8x128xf32>
    %c0_25 = arith.constant 0 : index
    %c0_26 = arith.constant 0 : index
    %34 = vector.load %arg4[%c0_25, %c0_26] : memref<128x128xf32, #tpu.memory_space<vmem>>, vector<128x128xf32>
    %cst_27 = arith.constant dense<0.000000e+00> : vector<8x128xf32>
    %35 = tpu.matmul %33, %34, %cst_27 {dimension_numbers = #tpu.dot_dimension_numbers<[1], [0], [0], [1], [0, 0, 1, 1], [], []>} : vector<8x128xf32>, vector<128x128xf32>, vector<8x128xf32> -> vector<8x128xf32>
    %36 = arith.addf %35, %29 : vector<8x128xf32>
    %37 = arith.addf %36, %8 : vector<8x128xf32>
    %38 = math.tanh %37 : vector<8x128xf32>
    %39 = vector.extract_strided_slice %5 {offsets = [24, 0], sizes = [8, 128], strides = [1, 1]} : vector<64x128xf32> to vector<8x128xf32>
    %c0_28 = arith.constant 0 : index
    %c0_29 = arith.constant 0 : index
    %40 = vector.load %arg5[%c0_28, %c0_29] : memref<128x128xf32, #tpu.memory_space<vmem>>, vector<128x128xf32>
    %cst_30 = arith.constant dense<0.000000e+00> : vector<8x128xf32>
    %41 = tpu.matmul %38, %40, %cst_30 {dimension_numbers = #tpu.dot_dimension_numbers<[1], [0], [0], [1], [0, 0, 1, 1], [], []>} : vector<8x128xf32>, vector<128x128xf32>, vector<8x128xf32> -> vector<8x128xf32>
    %c0_31 = arith.constant 0 : index
    %c0_32 = arith.constant 0 : index
    %42 = vector.load %arg2[%c0_31, %c0_32] : memref<128x128xf32, #tpu.memory_space<vmem>>, vector<128x128xf32>
    %cst_33 = arith.constant dense<0.000000e+00> : vector<8x128xf32>
    %43 = tpu.matmul %33, %42, %cst_33 {dimension_numbers = #tpu.dot_dimension_numbers<[1], [0], [0], [1], [0, 0, 1, 1], [], []>} : vector<8x128xf32>, vector<128x128xf32>, vector<8x128xf32> -> vector<8x128xf32>
    %44 = arith.addf %39, %43 : vector<8x128xf32>
    %45 = math.tanh %44 : vector<8x128xf32>
    %c0_34 = arith.constant 0 : index
    %c0_35 = arith.constant 0 : index
    %46 = vector.load %arg4[%c0_34, %c0_35] : memref<128x128xf32, #tpu.memory_space<vmem>>, vector<128x128xf32>
    %cst_36 = arith.constant dense<0.000000e+00> : vector<8x128xf32>
    %47 = tpu.matmul %45, %46, %cst_36 {dimension_numbers = #tpu.dot_dimension_numbers<[1], [0], [0], [1], [0, 0, 1, 1], [], []>} : vector<8x128xf32>, vector<128x128xf32>, vector<8x128xf32> -> vector<8x128xf32>
    %48 = arith.addf %47, %41 : vector<8x128xf32>
    %49 = arith.addf %48, %8 : vector<8x128xf32>
    %50 = math.tanh %49 : vector<8x128xf32>
    %51 = vector.extract_strided_slice %5 {offsets = [32, 0], sizes = [8, 128], strides = [1, 1]} : vector<64x128xf32> to vector<8x128xf32>
    %c0_37 = arith.constant 0 : index
    %c0_38 = arith.constant 0 : index
    %52 = vector.load %arg5[%c0_37, %c0_38] : memref<128x128xf32, #tpu.memory_space<vmem>>, vector<128x128xf32>
    %cst_39 = arith.constant dense<0.000000e+00> : vector<8x128xf32>
    %53 = tpu.matmul %50, %52, %cst_39 {dimension_numbers = #tpu.dot_dimension_numbers<[1], [0], [0], [1], [0, 0, 1, 1], [], []>} : vector<8x128xf32>, vector<128x128xf32>, vector<8x128xf32> -> vector<8x128xf32>
    %c0_40 = arith.constant 0 : index
    %c0_41 = arith.constant 0 : index
    %54 = vector.load %arg2[%c0_40, %c0_41] : memref<128x128xf32, #tpu.memory_space<vmem>>, vector<128x128xf32>
    %cst_42 = arith.constant dense<0.000000e+00> : vector<8x128xf32>
    %55 = tpu.matmul %45, %54, %cst_42 {dimension_numbers = #tpu.dot_dimension_numbers<[1], [0], [0], [1], [0, 0, 1, 1], [], []>} : vector<8x128xf32>, vector<128x128xf32>, vector<8x128xf32> -> vector<8x128xf32>
    %56 = arith.addf %51, %55 : vector<8x128xf32>
    %57 = math.tanh %56 : vector<8x128xf32>
    %c0_43 = arith.constant 0 : index
    %c0_44 = arith.constant 0 : index
    %58 = vector.load %arg4[%c0_43, %c0_44] : memref<128x128xf32, #tpu.memory_space<vmem>>, vector<128x128xf32>
    %cst_45 = arith.constant dense<0.000000e+00> : vector<8x128xf32>
    %59 = tpu.matmul %57, %58, %cst_45 {dimension_numbers = #tpu.dot_dimension_numbers<[1], [0], [0], [1], [0, 0, 1, 1], [], []>} : vector<8x128xf32>, vector<128x128xf32>, vector<8x128xf32> -> vector<8x128xf32>
    %60 = arith.addf %59, %53 : vector<8x128xf32>
    %61 = arith.addf %60, %8 : vector<8x128xf32>
    %62 = math.tanh %61 : vector<8x128xf32>
    %63 = vector.extract_strided_slice %5 {offsets = [40, 0], sizes = [8, 128], strides = [1, 1]} : vector<64x128xf32> to vector<8x128xf32>
    %c0_46 = arith.constant 0 : index
    %c0_47 = arith.constant 0 : index
    %64 = vector.load %arg5[%c0_46, %c0_47] : memref<128x128xf32, #tpu.memory_space<vmem>>, vector<128x128xf32>
    %cst_48 = arith.constant dense<0.000000e+00> : vector<8x128xf32>
    %65 = tpu.matmul %62, %64, %cst_48 {dimension_numbers = #tpu.dot_dimension_numbers<[1], [0], [0], [1], [0, 0, 1, 1], [], []>} : vector<8x128xf32>, vector<128x128xf32>, vector<8x128xf32> -> vector<8x128xf32>
    %c0_49 = arith.constant 0 : index
    %c0_50 = arith.constant 0 : index
    %66 = vector.load %arg2[%c0_49, %c0_50] : memref<128x128xf32, #tpu.memory_space<vmem>>, vector<128x128xf32>
    %cst_51 = arith.constant dense<0.000000e+00> : vector<8x128xf32>
    %67 = tpu.matmul %57, %66, %cst_51 {dimension_numbers = #tpu.dot_dimension_numbers<[1], [0], [0], [1], [0, 0, 1, 1], [], []>} : vector<8x128xf32>, vector<128x128xf32>, vector<8x128xf32> -> vector<8x128xf32>
    %68 = arith.addf %63, %67 : vector<8x128xf32>
    %69 = math.tanh %68 : vector<8x128xf32>
    %c0_52 = arith.constant 0 : index
    %c0_53 = arith.constant 0 : index
    %70 = vector.load %arg4[%c0_52, %c0_53] : memref<128x128xf32, #tpu.memory_space<vmem>>, vector<128x128xf32>
    %cst_54 = arith.constant dense<0.000000e+00> : vector<8x128xf32>
    %71 = tpu.matmul %69, %70, %cst_54 {dimension_numbers = #tpu.dot_dimension_numbers<[1], [0], [0], [1], [0, 0, 1, 1], [], []>} : vector<8x128xf32>, vector<128x128xf32>, vector<8x128xf32> -> vector<8x128xf32>
    %72 = arith.addf %71, %65 : vector<8x128xf32>
    %73 = arith.addf %72, %8 : vector<8x128xf32>
    %74 = math.tanh %73 : vector<8x128xf32>
    %75 = vector.extract_strided_slice %5 {offsets = [48, 0], sizes = [8, 128], strides = [1, 1]} : vector<64x128xf32> to vector<8x128xf32>
    %c0_55 = arith.constant 0 : index
    %c0_56 = arith.constant 0 : index
    %76 = vector.load %arg5[%c0_55, %c0_56] : memref<128x128xf32, #tpu.memory_space<vmem>>, vector<128x128xf32>
    %cst_57 = arith.constant dense<0.000000e+00> : vector<8x128xf32>
    %77 = tpu.matmul %74, %76, %cst_57 {dimension_numbers = #tpu.dot_dimension_numbers<[1], [0], [0], [1], [0, 0, 1, 1], [], []>} : vector<8x128xf32>, vector<128x128xf32>, vector<8x128xf32> -> vector<8x128xf32>
    %c0_58 = arith.constant 0 : index
    %c0_59 = arith.constant 0 : index
    %78 = vector.load %arg2[%c0_58, %c0_59] : memref<128x128xf32, #tpu.memory_space<vmem>>, vector<128x128xf32>
    %cst_60 = arith.constant dense<0.000000e+00> : vector<8x128xf32>
    %79 = tpu.matmul %69, %78, %cst_60 {dimension_numbers = #tpu.dot_dimension_numbers<[1], [0], [0], [1], [0, 0, 1, 1], [], []>} : vector<8x128xf32>, vector<128x128xf32>, vector<8x128xf32> -> vector<8x128xf32>
    %80 = arith.addf %75, %79 : vector<8x128xf32>
    %81 = math.tanh %80 : vector<8x128xf32>
    %c0_61 = arith.constant 0 : index
    %c0_62 = arith.constant 0 : index
    %82 = vector.load %arg4[%c0_61, %c0_62] : memref<128x128xf32, #tpu.memory_space<vmem>>, vector<128x128xf32>
    %cst_63 = arith.constant dense<0.000000e+00> : vector<8x128xf32>
    %83 = tpu.matmul %81, %82, %cst_63 {dimension_numbers = #tpu.dot_dimension_numbers<[1], [0], [0], [1], [0, 0, 1, 1], [], []>} : vector<8x128xf32>, vector<128x128xf32>, vector<8x128xf32> -> vector<8x128xf32>
    %84 = arith.addf %83, %77 : vector<8x128xf32>
    %85 = arith.addf %84, %8 : vector<8x128xf32>
    %86 = math.tanh %85 : vector<8x128xf32>
    %87 = vector.extract_strided_slice %5 {offsets = [56, 0], sizes = [8, 128], strides = [1, 1]} : vector<64x128xf32> to vector<8x128xf32>
    %c0_64 = arith.constant 0 : index
    %c0_65 = arith.constant 0 : index
    %88 = vector.load %arg5[%c0_64, %c0_65] : memref<128x128xf32, #tpu.memory_space<vmem>>, vector<128x128xf32>
    %cst_66 = arith.constant dense<0.000000e+00> : vector<8x128xf32>
    %89 = tpu.matmul %86, %88, %cst_66 {dimension_numbers = #tpu.dot_dimension_numbers<[1], [0], [0], [1], [0, 0, 1, 1], [], []>} : vector<8x128xf32>, vector<128x128xf32>, vector<8x128xf32> -> vector<8x128xf32>
    %c0_67 = arith.constant 0 : index
    %c0_68 = arith.constant 0 : index
    %90 = vector.load %arg2[%c0_67, %c0_68] : memref<128x128xf32, #tpu.memory_space<vmem>>, vector<128x128xf32>
    %cst_69 = arith.constant dense<0.000000e+00> : vector<8x128xf32>
    %91 = tpu.matmul %81, %90, %cst_69 {dimension_numbers = #tpu.dot_dimension_numbers<[1], [0], [0], [1], [0, 0, 1, 1], [], []>} : vector<8x128xf32>, vector<128x128xf32>, vector<8x128xf32> -> vector<8x128xf32>
    %92 = arith.addf %87, %91 : vector<8x128xf32>
    %93 = math.tanh %92 : vector<8x128xf32>
    %c0_70 = arith.constant 0 : index
    %c0_71 = arith.constant 0 : index
    %94 = vector.load %arg4[%c0_70, %c0_71] : memref<128x128xf32, #tpu.memory_space<vmem>>, vector<128x128xf32>
    %cst_72 = arith.constant dense<0.000000e+00> : vector<8x128xf32>
    %95 = tpu.matmul %93, %94, %cst_72 {dimension_numbers = #tpu.dot_dimension_numbers<[1], [0], [0], [1], [0, 0, 1, 1], [], []>} : vector<8x128xf32>, vector<128x128xf32>, vector<8x128xf32> -> vector<8x128xf32>
    %96 = arith.addf %95, %89 : vector<8x128xf32>
    %97 = arith.addf %96, %8 : vector<8x128xf32>
    %98 = math.tanh %97 : vector<8x128xf32>
    %cst_73 = arith.constant 0.000000e+00 : f32
    %99 = vector.broadcast %cst_73 : f32 to vector<8x128xf32>
    %100 = arith.maximumf %98, %99 : vector<8x128xf32>
    %c0_74 = arith.constant 0 : index
    %c0_75 = arith.constant 0 : index
    %101 = vector.load %arg7[%c0_74, %c0_75] : memref<128x10xf32, #tpu.memory_space<vmem>>, vector<128x10xf32>
    %cst_76 = arith.constant dense<0.000000e+00> : vector<8x10xf32>
    %102 = tpu.matmul %100, %101, %cst_76 {dimension_numbers = #tpu.dot_dimension_numbers<[1], [0], [0], [1], [0, 0, 1, 1], [], []>} : vector<8x128xf32>, vector<128x10xf32>, vector<8x10xf32> -> vector<8x10xf32>
    %c0_77 = arith.constant 0 : index
    %c0_78 = arith.constant 0 : index
    %103 = vector.load %arg8[%c0_77, %c0_78] : memref<1x10xf32, #tpu.memory_space<vmem>>, vector<1x10xf32>
    %104 = vector.broadcast %103 : vector<1x10xf32> to vector<8x10xf32>
    %105 = arith.addf %102, %104 : vector<8x10xf32>
    %106 = arith.negf %105 : vector<8x10xf32>
    %107 = math.exp %106 : vector<8x10xf32>
    %cst_79 = arith.constant 1.000000e+00 : f32
    %108 = vector.broadcast %cst_79 : f32 to vector<8x10xf32>
    %109 = arith.addf %108, %107 : vector<8x10xf32>
    %110 = arith.divf %108, %109 : vector<8x10xf32>
    %c0_80 = arith.constant 0 : index
    %c0_81 = arith.constant 0 : index
    %111 = vector.load %arg9[%c0_80, %c0_81] : memref<8x10xf32, #tpu.memory_space<vmem>>, vector<8x10xf32>
    tpu.vector_store %arg9[%c0_80, %c0_81], %110 {strides = array<i32>} : memref<8x10xf32, #tpu.memory_space<vmem>>, vector<8x10xf32>,
    return
  }
}

</mosaic_0001>

<llo_original>
// kernel: rnn_forward.1
$region0: #{rnn_forward.1}
  #allocation0 [shape = 'u32[]', space=smem, size = 0x4, offset = 0x4, fixed_abs, tag = 'smem constant byte address 0x4 - core index']
  #allocation1 [shape = 'u32[144,128]{1,0:T(1,128)}', space=vmem, size = 0x12000, scoped, tag = 'internal scratch']
  %s0 = inlined_call_operand.vmem [shape: f32[64,26], index: 0, kind: input, shape index: {}]
  %s1 = inlined_call_operand.hbm [shape: f32[26,128], index: 1, kind: input, shape index: {}]
  %s2 = inlined_call_operand.vmem [shape: f32[128,128], index: 2, kind: input, shape index: {}]
  %s3 = inlined_call_operand.vmem [shape: f32[1,128], index: 3, kind: input, shape index: {}]
  %s4 = inlined_call_operand.vmem [shape: f32[128,128], index: 4, kind: input, shape index: {}]
  %s5 = inlined_call_operand.hbm [shape: f32[128,128], index: 5, kind: input, shape index: {}]
  %s6 = inlined_call_operand.vmem [shape: f32[1,128], index: 6, kind: input, shape index: {}]
  %s7 = inlined_call_operand.vmem [shape: f32[128,10], index: 7, kind: input, shape index: {}]
  %s8 = inlined_call_operand.hbm [shape: f32[1,10], index: 8, kind: input, shape index: {}]
  %s9 = inlined_call_operand.vmem [shape: f32[8,10], index: 9, kind: output, shape index: {}]
  %s10 = sld [smem:[#allocation0]]
  $region58: #{rnn_forward.1} parent=0
    _
  %s12 = ssub.s32 1, %s10
  %s13 = scalar_select 0, %s12, %s10
  $region1: #{rnn_forward.1} parent=0
    #allocation2 [shape = 'u8[16384]{0}', space=vmem, size = 0x4000, scoped, tag = 'input window, operand 1, single buffered']
    #allocation3 [shape = 's32[1]{0}', space=sflag, size = 0x4, scoped, tag = 'scoped memory for rnn_forward.1']
    #allocation4 [shape = 'u8[65536]{0}', space=vmem, size = 0x10000, scoped, tag = 'input window, operand 5, single buffered']
    #allocation5 [shape = 's32[1]{0}', space=sflag, size = 0x4, scoped, tag = 'scoped memory for rnn_forward.1']
    #allocation6 [shape = 'u8[512]{0}', space=vmem, size = 0x400, scoped, tag = 'input window, operand 8, single buffered']
    %14 = vsyncpa [#allocation3], 0
    %15 = vsyncpa [#allocation5], 0
    // Predicated region
    $region2: #{rnn_forward.1} parent=1 // pred_check
      _
    $region3: #{rnn_forward.1} parent=1 // pred_check_branch
      %17 = sbr.rel (0) target = $region5
    $region4: #{rnn_forward.1} parent=1 // pred_region
      _
    $region5: #{rnn_forward.1} parent=1 // pred_fallthru
      _
    // Predicated region
    $region6: #{rnn_forward.1} parent=1 // pred_check
      _
    $region7: #{rnn_forward.1} parent=1 // pred_check_branch
      %19 = sbr.rel (0) target = $region9
    $region8: #{rnn_forward.1} parent=1 // pred_region
      %s21 = ssub.s32 512, 512
      %22 = vsyncadd [#allocation3], %s21
      %s23 = sshll.u32 [#allocation2], 4
      %s24 = int_to_ptr.vmem [resolvable:$true] %s23
      %29 = dma.hbm_to_vmem [thread:$0]  %s1, 512, %s24, [#allocation3], 128, 128, 8
    $region9: #{rnn_forward.1} parent=1 // pred_fallthru
      _
    // Predicated region
    $region10: #{rnn_forward.1} parent=1 // pred_check
      _
    $region11: #{rnn_forward.1} parent=1 // pred_check_branch
      %31 = sbr.rel (0) target = $region13
    $region12: #{rnn_forward.1} parent=1 // pred_region
      _
    $region13: #{rnn_forward.1} parent=1 // pred_fallthru
      _
    // Predicated region
    $region14: #{rnn_forward.1} parent=1 // pred_check
      _
    $region15: #{rnn_forward.1} parent=1 // pred_check_branch
      %33 = sbr.rel (0) target = $region17
    $region16: #{rnn_forward.1} parent=1 // pred_region
      _
    $region17: #{rnn_forward.1} parent=1 // pred_fallthru
      _
    // Predicated region
    $region18: #{rnn_forward.1} parent=1 // pred_check
      _
    $region19: #{rnn_forward.1} parent=1 // pred_check_branch
      %35 = sbr.rel (0) target = $region21
    $region20: #{rnn_forward.1} parent=1 // pred_region
      _
    $region21: #{rnn_forward.1} parent=1 // pred_fallthru
      _
    // Predicated region
    $region22: #{rnn_forward.1} parent=1 // pred_check
      _
    $region23: #{rnn_forward.1} parent=1 // pred_check_branch
      %37 = sbr.rel (0) target = $region25
    $region24: #{rnn_forward.1} parent=1 // pred_region
      %s39 = ssub.s32 2048, 2048
      %40 = vsyncadd [#allocation5], %s39
      %s41 = sshll.u32 [#allocation4], 4
      %s42 = int_to_ptr.vmem [resolvable:$true] %s41
      %47 = dma.hbm_to_vmem [thread:$0]  %s5, 2048, %s42, [#allocation5], 128, 128, 8
    $region25: #{rnn_forward.1} parent=1 // pred_fallthru
      _
    // Predicated region
    $region26: #{rnn_forward.1} parent=1 // pred_check
      _
    $region27: #{rnn_forward.1} parent=1 // pred_check_branch
      %49 = sbr.rel (0) target = $region29
    $region28: #{rnn_forward.1} parent=1 // pred_region
      _
    $region29: #{rnn_forward.1} parent=1 // pred_fallthru
      _
    // Predicated region
    $region30: #{rnn_forward.1} parent=1 // pred_check
      _
    $region31: #{rnn_forward.1} parent=1 // pred_check_branch
      %51 = sbr.rel (0) target = $region33
    $region32: #{rnn_forward.1} parent=1 // pred_region
      _
    $region33: #{rnn_forward.1} parent=1 // pred_fallthru
      _
    // Predicated region
    $region34: #{rnn_forward.1} parent=1 // pred_check
      _
    $region35: #{rnn_forward.1} parent=1 // pred_check_branch
      %53 = sbr.rel (0) target = $region37
    $region36: #{rnn_forward.1} parent=1 // pred_region
      %s55 = ssub.s32 16, 16
      %56 = vsyncadd [#allocation5], %s55
      %s58 = sshll.u32 [#allocation6], 4
      %s59 = int_to_ptr.vmem [resolvable:$true] %s58
      %61 = dma.hbm_to_vmem [thread:$0]  %s8, 16, %s59, [#allocation5]
    $region37: #{rnn_forward.1} parent=1 // pred_fallthru
      _
    // Predicated region
    $region38: #{rnn_forward.1} parent=1 // pred_check
      _
    $region39: #{rnn_forward.1} parent=1 // pred_check_branch
      %63 = sbr.rel (0) target = $region41
    $region40: #{rnn_forward.1} parent=1 // pred_region
      %64 = dma.done [#allocation3], 512
    $region41: #{rnn_forward.1} parent=1 // pred_fallthru
      _
    // Predicated region
    $region42: #{rnn_forward.1} parent=1 // pred_check
      _
    $region43: #{rnn_forward.1} parent=1 // pred_check_branch
      %66 = sbr.rel (0) target = $region45
    $region44: #{rnn_forward.1} parent=1 // pred_region
      %67 = dma.done [#allocation5], 2048
    $region45: #{rnn_forward.1} parent=1 // pred_fallthru
      _
    // Predicated region
    $region46: #{rnn_forward.1} parent=1 // pred_check
      _
    $region47: #{rnn_forward.1} parent=1 // pred_check_branch
      %69 = sbr.rel (0) target = $region49
    $region48: #{rnn_forward.1} parent=1 // pred_region
      %70 = dma.done [#allocation5], 16
    $region49: #{rnn_forward.1} parent=1 // pred_fallthru
      _
    %v71 = vld [vmem:[%s0] sm:$0xff]
    %v72 = vld [vmem:[%s0 + $0x8] sm:$0xff]
    %v73 = vld [vmem:[%s0 + $0x10] sm:$0xff]
    %v74 = vld [vmem:[%s0 + $0x18] sm:$0xff]
    %v75 = vld [vmem:[%s0 + $0x20] sm:$0xff]
    %v76 = vld [vmem:[%s0 + $0x28] sm:$0xff]
    %v77 = vld [vmem:[%s0 + $0x30] sm:$0xff]
    %v78 = vld [vmem:[%s0 + $0x38] sm:$0xff]
    %v79 = vld [vmem:[#allocation2] sm:$0xff]
    %v80 = vld [vmem:[#allocation2 + $0x8] sm:$0xff]
    %v81 = vld [vmem:[#allocation2 + $0x10] sm:$0xff]
    %v82 = vld [vmem:[#allocation2 + $0x18] sm:$0x3]
    %v83 = vld [vmem:[%s3] sm:$0x1]
    %v85 = vlaneseq
    %v86 = vshrl.u32 %v85, 7
    %v87 = vsub.s32 0, %v86
    %v88 = vrot.slane %v83, %v87
    %vm90 = vcmask 211968
    %v92 = vsel %vm90, %v71, 0
    %v95 = vsel %vm90, %v72, 0
    %v98 = vsel %vm90, %v73, 0
    %v101 = vsel %vm90, %v74, 0
    %v104 = vsel %vm90, %v75, 0
    %v107 = vsel %vm90, %v76, 0
    %v110 = vsel %vm90, %v77, 0
    %v113 = vsel %vm90, %v78, 0
    %vm115 = vcmask 1041408
    %v117 = vsel %vm115, %v82, 0
    %119 = vmatprep.subr.mxu0 0.0
    %120 = vmatpush1.msra.mxu0 %v79
    %121 = vmatprep.subr.mxu0 0.0
    %122 = vmatpush1.msra.mxu0 %v80
    %123 = vmatprep.subr.mxu0 0.0
    %124 = vmatpush1.msra.mxu0 %v81
    %125 = vmatprep.subr.mxu0 0.0
    %126 = vmatpush1.msra.mxu0 %v117
    %127 = vmatprep.subr.mxu0 0.0
    %128 = vmatpush1.msra.mxu0 0.0
    %129 = vmatprep.subr.mxu0 0.0
    %130 = vmatpush1.msra.mxu0 0.0
    %131 = vmatprep.subr.mxu0 0.0
    %132 = vmatpush1.msra.mxu0 0.0
    %133 = vmatprep.subr.mxu0 0.0
    %134 = vmatpush1.msra.mxu0 0.0
    %135 = vmatprep.subr.mxu0 0.0
    %136 = vmatpush1.msra.mxu0 0.0
    %137 = vmatprep.subr.mxu0 0.0
    %138 = vmatpush1.msra.mxu0 0.0
    %139 = vmatprep.subr.mxu0 0.0
    %140 = vmatpush1.msra.mxu0 0.0
    %141 = vmatprep.subr.mxu0 0.0
    %142 = vmatpush1.msra.mxu0 0.0
    %143 = vmatprep.subr.mxu0 0.0
    %144 = vmatpush1.msra.mxu0 0.0
    %145 = vmatprep.subr.mxu0 0.0
    %146 = vmatpush1.msra.mxu0 0.0
    %147 = vmatprep.subr.mxu0 0.0
    %148 = vmatpush1.msra.mxu0 0.0
    %149 = vmatprep.subr.mxu0 0.0
    %150 = vmatpush1.msra.mxu0 0.0
    %151 = vmatprep.subr.mxu0 0.0
    %152 = vmatpush1.msra.mxu0 0.0
    %153 = vmatprep.subr.mxu0 0.0
    %154 = vmatpush1.msra.mxu0 0.0
    %155 = vmatprep.subr.mxu0 0.0
    %156 = vmatpush1.msra.mxu0 0.0
    %157 = vmatprep.subr.mxu0 0.0
    %158 = vmatpush1.msra.mxu0 0.0
    %159 = vmatprep.subr.mxu0 0.0
    %160 = vmatpush1.msra.mxu0 0.0
    %161 = vmatprep.subr.mxu0 0.0
    %162 = vmatpush1.msra.mxu0 0.0
    %163 = vmatprep.subr.mxu0 0.0
    %164 = vmatpush1.msra.mxu0 0.0
    %165 = vmatprep.subr.mxu0 0.0
    %166 = vmatpush1.msra.mxu0 0.0
    %167 = vmatprep.subr.mxu0 0.0
    %168 = vmatpush1.msra.mxu0 0.0
    %169 = vmatprep.subr.mxu0 0.0
    %170 = vmatpush1.msra.mxu0 0.0
    %171 = vmatprep.subr.mxu0 0.0
    %172 = vmatpush1.msra.mxu0 0.0
    %173 = vmatprep.subr.mxu0 0.0
    %174 = vmatpush1.msra.mxu0 0.0
    %175 = vmatprep.subr.mxu0 0.0
    %176 = vmatpush1.msra.mxu0 0.0
    %177 = vmatprep.subr.mxu0 0.0
    %178 = vmatpush1.msra.mxu0 0.0
    %179 = vmatprep.subr.mxu0 0.0
    %180 = vmatpush1.msra.mxu0 0.0
    %181 = vmatprep.subr.mxu0 0.0
    %182 = vmatpush1.msra.mxu0 0.0
    %183 = vmatprep.mubr.f32.mxu0 0.0
    %184 = vmatmul.mubr.f32.gmra.mrb[0].mxu0 %v92
    %v185 = vpop.f32.mrb[0].mxu0
    %v186 = vadd.f32 %v88, %v185
    %v187 = vpop.f32.mrb[0].mxu0
    %188 = vmatprep.mubr.f32.mxu0 0.0
    %189 = vmatmul.mubr.f32.gmra.mrb[0].mxu0 %v95
    %v190 = vpop.f32.mrb[0].mxu0
    %v191 = vadd.f32 %v88, %v190
    %v192 = vpop.f32.mrb[0].mxu0
    %193 = vmatprep.mubr.f32.mxu0 0.0
    %194 = vmatmul.mubr.f32.gmra.mrb[0].mxu0 %v98
    %v195 = vpop.f32.mrb[0].mxu0
    %v196 = vadd.f32 %v88, %v195
    %v197 = vpop.f32.mrb[0].mxu0
    %198 = vmatprep.mubr.f32.mxu0 0.0
    %199 = vmatmul.mubr.f32.gmra.mrb[0].mxu0 %v101
    %v200 = vpop.f32.mrb[0].mxu0
    %v201 = vadd.f32 %v88, %v200
    %v202 = vpop.f32.mrb[0].mxu0
    %203 = vmatprep.mubr.f32.mxu0 0.0
    %204 = vmatmul.mubr.f32.gmra.mrb[0].mxu0 %v104
    %v205 = vpop.f32.mrb[0].mxu0
    %v206 = vadd.f32 %v88, %v205
    %v207 = vpop.f32.mrb[0].mxu0
    %208 = vmatprep.mubr.f32.mxu0 0.0
    %209 = vmatmul.mubr.f32.gmra.mrb[0].mxu0 %v107
    %v210 = vpop.f32.mrb[0].mxu0
    %v211 = vadd.f32 %v88, %v210
    %v212 = vpop.f32.mrb[0].mxu0
    %213 = vmatprep.mubr.f32.mxu0 0.0
    %214 = vmatmul.mubr.f32.gmra.mrb[0].mxu0 %v110
    %v215 = vpop.f32.mrb[0].mxu0
    %v216 = vadd.f32 %v88, %v215
    %v217 = vpop.f32.mrb[0].mxu0
    %218 = vmatprep.mubr.f32.mxu0 0.0
    %219 = vmatmul.mubr.f32.gmra.mrb[0].mxu0 %v113
    %v220 = vpop.f32.mrb[0].mxu0
    %v221 = vadd.f32 %v88, %v220
    %v222 = vpop.f32.mrb[0].mxu0
    %223 = vdwg.mxu0
    %v224 = vld [vmem:[%s6] sm:$0x1]
    %v226 = vlaneseq
    %v227 = vshrl.u32 %v226, 7
    %v228 = vsub.s32 0, %v227
    %v229 = vrot.slane %v224, %v228
    %v231 = vtanh.pop %v186
    %v232 = vld [vmem:[%s4] sm:$0xff]
    %v233 = vld [vmem:[%s4 + $0x8] sm:$0xff]
    %v234 = vld [vmem:[%s4 + $0x10] sm:$0xff]
    %v235 = vld [vmem:[%s4 + $0x18] sm:$0xff]
    %v236 = vld [vmem:[%s4 + $0x20] sm:$0xff]
    %v237 = vld [vmem:[%s4 + $0x28] sm:$0xff]
    %v238 = vld [vmem:[%s4 + $0x30] sm:$0xff]
    %v239 = vld [vmem:[%s4 + $0x38] sm:$0xff]
    %v240 = vld [vmem:[%s4 + $0x40] sm:$0xff]
    %v241 = vld [vmem:[%s4 + $0x48] sm:$0xff]
    %v242 = vld [vmem:[%s4 + $0x50] sm:$0xff]
    %v243 = vld [vmem:[%s4 + $0x58] sm:$0xff]
    %v244 = vld [vmem:[%s4 + $0x60] sm:$0xff]
    %v245 = vld [vmem:[%s4 + $0x68] sm:$0xff]
    %v246 = vld [vmem:[%s4 + $0x70] sm:$0xff]
    %v247 = vld [vmem:[%s4 + $0x78] sm:$0xff]
    %248 = vmatprep.subr.mxu0 0.0
    %249 = vmatpush1.msra.mxu0 %v232
    %250 = vmatprep.subr.mxu0 0.0
    %251 = vmatpush1.msra.mxu0 %v233
    %252 = vmatprep.subr.mxu0 0.0
    %253 = vmatpush1.msra.mxu0 %v234
    %254 = vmatprep.subr.mxu0 0.0
    %255 = vmatpush1.msra.mxu0 %v235
    %256 = vmatprep.subr.mxu0 0.0
    %257 = vmatpush1.msra.mxu0 %v236
    %258 = vmatprep.subr.mxu0 0.0
    %259 = vmatpush1.msra.mxu0 %v237
    %260 = vmatprep.subr.mxu0 0.0
    %261 = vmatpush1.msra.mxu0 %v238
    %262 = vmatprep.subr.mxu0 0.0
    %263 = vmatpush1.msra.mxu0 %v239
    %264 = vmatprep.subr.mxu0 0.0
    %265 = vmatpush1.msra.mxu0 %v240
    %266 = vmatprep.subr.mxu0 0.0
    %267 = vmatpush1.msra.mxu0 %v241
    %268 = vmatprep.subr.mxu0 0.0
    %269 = vmatpush1.msra.mxu0 %v242
    %270 = vmatprep.subr.mxu0 0.0
    %271 = vmatpush1.msra.mxu0 %v243
    %272 = vmatprep.subr.mxu0 0.0
    %273 = vmatpush1.msra.mxu0 %v244
    %274 = vmatprep.subr.mxu0 0.0
    %275 = vmatpush1.msra.mxu0 %v245
    %276 = vmatprep.subr.mxu0 0.0
    %277 = vmatpush1.msra.mxu0 %v246
    %278 = vmatprep.subr.mxu0 0.0
    %279 = vmatpush1.msra.mxu0 %v247
    %280 = vmatprep.subr.mxu0 0.0
    %281 = vmatpush1.msra.mxu0 0.0
    %282 = vmatprep.subr.mxu0 0.0
    %283 = vmatpush1.msra.mxu0 0.0
    %284 = vmatprep.subr.mxu0 0.0
    %285 = vmatpush1.msra.mxu0 0.0
    %286 = vmatprep.subr.mxu0 0.0
    %287 = vmatpush1.msra.mxu0 0.0
    %288 = vmatprep.subr.mxu0 0.0
    %289 = vmatpush1.msra.mxu0 0.0
    %290 = vmatprep.subr.mxu0 0.0
    %291 = vmatpush1.msra.mxu0 0.0
    %292 = vmatprep.subr.mxu0 0.0
    %293 = vmatpush1.msra.mxu0 0.0
    %294 = vmatprep.subr.mxu0 0.0
    %295 = vmatpush1.msra.mxu0 0.0
    %296 = vmatprep.subr.mxu0 0.0
    %297 = vmatpush1.msra.mxu0 0.0
    %298 = vmatprep.subr.mxu0 0.0
    %299 = vmatpush1.msra.mxu0 0.0
    %300 = vmatprep.subr.mxu0 0.0
    %301 = vmatpush1.msra.mxu0 0.0
    %302 = vmatprep.subr.mxu0 0.0
    %303 = vmatpush1.msra.mxu0 0.0
    %304 = vmatprep.subr.mxu0 0.0
    %305 = vmatpush1.msra.mxu0 0.0
    %306 = vmatprep.subr.mxu0 0.0
    %307 = vmatpush1.msra.mxu0 0.0
    %308 = vmatprep.subr.mxu0 0.0
    %309 = vmatpush1.msra.mxu0 0.0
    %310 = vmatprep.subr.mxu0 0.0
    %311 = vmatpush1.msra.mxu0 0.0
    %312 = vmatprep.mubr.f32.mxu0 0.0
    %313 = vmatmul.mubr.f32.gmra.mrb[0].mxu0 %v231
    %v314 = vpop.f32.mrb[0].mxu0
    %v315 = vadd.f32 %v229, %v314
    %v316 = vpop.f32.mrb[0].mxu0
    %317 = vdwg.mxu0
    %v318 = vtanh.pop %v315
    %v319 = vld [vmem:[#allocation4] sm:$0xff]
    %v320 = vld [vmem:[#allocation4 + $0x8] sm:$0xff]
    %v321 = vld [vmem:[#allocation4 + $0x10] sm:$0xff]
    %v322 = vld [vmem:[#allocation4 + $0x18] sm:$0xff]
    %v323 = vld [vmem:[#allocation4 + $0x20] sm:$0xff]
    %v324 = vld [vmem:[#allocation4 + $0x28] sm:$0xff]
    %v325 = vld [vmem:[#allocation4 + $0x30] sm:$0xff]
    %v326 = vld [vmem:[#allocation4 + $0x38] sm:$0xff]
    %v327 = vld [vmem:[#allocation4 + $0x40] sm:$0xff]
    %v328 = vld [vmem:[#allocation4 + $0x48] sm:$0xff]
    %v329 = vld [vmem:[#allocation4 + $0x50] sm:$0xff]
    %v330 = vld [vmem:[#allocation4 + $0x58] sm:$0xff]
    %v331 = vld [vmem:[#allocation4 + $0x60] sm:$0xff]
    %v332 = vld [vmem:[#allocation4 + $0x68] sm:$0xff]
    %v333 = vld [vmem:[#allocation4 + $0x70] sm:$0xff]
    %v334 = vld [vmem:[#allocation4 + $0x78] sm:$0xff]
    %335 = vmatprep.subr.mxu0 0.0
    %336 = vmatpush1.msra.mxu0 %v319
    %337 = vmatprep.subr.mxu0 0.0
    %338 = vmatpush1.msra.mxu0 %v320
    %339 = vmatprep.subr.mxu0 0.0
    %340 = vmatpush1.msra.mxu0 %v321
    %341 = vmatprep.subr.mxu0 0.0
    %342 = vmatpush1.msra.mxu0 %v322
    %343 = vmatprep.subr.mxu0 0.0
    %344 = vmatpush1.msra.mxu0 %v323
    %345 = vmatprep.subr.mxu0 0.0
    %346 = vmatpush1.msra.mxu0 %v324
    %347 = vmatprep.subr.mxu0 0.0
    %348 = vmatpush1.msra.mxu0 %v325
    %349 = vmatprep.subr.mxu0 0.0
    %350 = vmatpush1.msra.mxu0 %v326
    %351 = vmatprep.subr.mxu0 0.0
    %352 = vmatpush1.msra.mxu0 %v327
    %353 = vmatprep.subr.mxu0 0.0
    %354 = vmatpush1.msra.mxu0 %v328
    %355 = vmatprep.subr.mxu0 0.0
    %356 = vmatpush1.msra.mxu0 %v329
    %357 = vmatprep.subr.mxu0 0.0
    %358 = vmatpush1.msra.mxu0 %v330
    %359 = vmatprep.subr.mxu0 0.0
    %360 = vmatpush1.msra.mxu0 %v331
    %361 = vmatprep.subr.mxu0 0.0
    %362 = vmatpush1.msra.mxu0 %v332
    %363 = vmatprep.subr.mxu0 0.0
    %364 = vmatpush1.msra.mxu0 %v333
    %365 = vmatprep.subr.mxu0 0.0
    %366 = vmatpush1.msra.mxu0 %v334
    %367 = vmatprep.subr.mxu0 0.0
    %368 = vmatpush1.msra.mxu0 0.0
    %369 = vmatprep.subr.mxu0 0.0
    %370 = vmatpush1.msra.mxu0 0.0
    %371 = vmatprep.subr.mxu0 0.0
    %372 = vmatpush1.msra.mxu0 0.0
    %373 = vmatprep.subr.mxu0 0.0
    %374 = vmatpush1.msra.mxu0 0.0
    %375 = vmatprep.subr.mxu0 0.0
    %376 = vmatpush1.msra.mxu0 0.0
    %377 = vmatprep.subr.mxu0 0.0
    %378 = vmatpush1.msra.mxu0 0.0
    %379 = vmatprep.subr.mxu0 0.0
    %380 = vmatpush1.msra.mxu0 0.0
    %381 = vmatprep.subr.mxu0 0.0
    %382 = vmatpush1.msra.mxu0 0.0
    %383 = vmatprep.subr.mxu0 0.0
    %384 = vmatpush1.msra.mxu0 0.0
    %385 = vmatprep.subr.mxu0 0.0
    %386 = vmatpush1.msra.mxu0 0.0
    %387 = vmatprep.subr.mxu0 0.0
    %388 = vmatpush1.msra.mxu0 0.0
    %389 = vmatprep.subr.mxu0 0.0
    %390 = vmatpush1.msra.mxu0 0.0
    %391 = vmatprep.subr.mxu0 0.0
    %392 = vmatpush1.msra.mxu0 0.0
    %393 = vmatprep.subr.mxu0 0.0
    %394 = vmatpush1.msra.mxu0 0.0
    %395 = vmatprep.subr.mxu0 0.0
    %396 = vmatpush1.msra.mxu0 0.0
    %397 = vmatprep.subr.mxu0 0.0
    %398 = vmatpush1.msra.mxu0 0.0
    %399 = vmatprep.mubr.f32.mxu0 0.0
    %400 = vmatmul.mubr.f32.gmra.mrb[0].mxu0 %v318
    %v401 = vpop.f32.mrb[0].mxu0
    %v402 = vadd.f32 0.0, %v401
    %v403 = vpop.f32.mrb[0].mxu0
    %404 = vdwg.mxu0
    %v405 = vld [vmem:[%s2] sm:$0xff]
    %v406 = vld [vmem:[%s2 + $0x8] sm:$0xff]
    %v407 = vld [vmem:[%s2 + $0x10] sm:$0xff]
    %v408 = vld [vmem:[%s2 + $0x18] sm:$0xff]
    %v409 = vld [vmem:[%s2 + $0x20] sm:$0xff]
    %v410 = vld [vmem:[%s2 + $0x28] sm:$0xff]
    %v411 = vld [vmem:[%s2 + $0x30] sm:$0xff]
    %v412 = vld [vmem:[%s2 + $0x38] sm:$0xff]
    %v413 = vld [vmem:[%s2 + $0x40] sm:$0xff]
    %v414 = vld [vmem:[%s2 + $0x48] sm:$0xff]
    %v415 = vld [vmem:[%s2 + $0x50] sm:$0xff]
    %v416 = vld [vmem:[%s2 + $0x58] sm:$0xff]
    %v417 = vld [vmem:[%s2 + $0x60] sm:$0xff]
    %v418 = vld [vmem:[%s2 + $0x68] sm:$0xff]
    %v419 = vld [vmem:[%s2 + $0x70] sm:$0xff]
    %v420 = vld [vmem:[%s2 + $0x78] sm:$0xff]
    %421 = vmatprep.subr.mxu0 0.0
    %422 = vmatpush1.msra.mxu0 %v405
    %423 = vmatprep.subr.mxu0 0.0
    %424 = vmatpush1.msra.mxu0 %v406
    %425 = vmatprep.subr.mxu0 0.0
    %426 = vmatpush1.msra.mxu0 %v407
    %427 = vmatprep.subr.mxu0 0.0
    %428 = vmatpush1.msra.mxu0 %v408
    %429 = vmatprep.subr.mxu0 0.0
    %430 = vmatpush1.msra.mxu0 %v409
    %431 = vmatprep.subr.mxu0 0.0
    %432 = vmatpush1.msra.mxu0 %v410
    %433 = vmatprep.subr.mxu0 0.0
    %434 = vmatpush1.msra.mxu0 %v411
    %435 = vmatprep.subr.mxu0 0.0
    %436 = vmatpush1.msra.mxu0 %v412
    %437 = vmatprep.subr.mxu0 0.0
    %438 = vmatpush1.msra.mxu0 %v413
    %439 = vmatprep.subr.mxu0 0.0
    %440 = vmatpush1.msra.mxu0 %v414
    %441 = vmatprep.subr.mxu0 0.0
    %442 = vmatpush1.msra.mxu0 %v415
    %443 = vmatprep.subr.mxu0 0.0
    %444 = vmatpush1.msra.mxu0 %v416
    %445 = vmatprep.subr.mxu0 0.0
    %446 = vmatpush1.msra.mxu0 %v417
    %447 = vmatprep.subr.mxu0 0.0
    %448 = vmatpush1.msra.mxu0 %v418
    %449 = vmatprep.subr.mxu0 0.0
    %450 = vmatpush1.msra.mxu0 %v419
    %451 = vmatprep.subr.mxu0 0.0
    %452 = vmatpush1.msra.mxu0 %v420
    %453 = vmatprep.subr.mxu0 0.0
    %454 = vmatpush1.msra.mxu0 0.0
    %455 = vmatprep.subr.mxu0 0.0
    %456 = vmatpush1.msra.mxu0 0.0
    %457 = vmatprep.subr.mxu0 0.0
    %458 = vmatpush1.msra.mxu0 0.0
    %459 = vmatprep.subr.mxu0 0.0
    %460 = vmatpush1.msra.mxu0 0.0
    %461 = vmatprep.subr.mxu0 0.0
    %462 = vmatpush1.msra.mxu0 0.0
    %463 = vmatprep.subr.mxu0 0.0
    %464 = vmatpush1.msra.mxu0 0.0
    %465 = vmatprep.subr.mxu0 0.0
    %466 = vmatpush1.msra.mxu0 0.0
    %467 = vmatprep.subr.mxu0 0.0
    %468 = vmatpush1.msra.mxu0 0.0
    %469 = vmatprep.subr.mxu0 0.0
    %470 = vmatpush1.msra.mxu0 0.0
    %471 = vmatprep.subr.mxu0 0.0
    %472 = vmatpush1.msra.mxu0 0.0
    %473 = vmatprep.subr.mxu0 0.0
    %474 = vmatpush1.msra.mxu0 0.0
    %475 = vmatprep.subr.mxu0 0.0
    %476 = vmatpush1.msra.mxu0 0.0
    %477 = vmatprep.subr.mxu0 0.0
    %478 = vmatpush1.msra.mxu0 0.0
    %479 = vmatprep.subr.mxu0 0.0
    %480 = vmatpush1.msra.mxu0 0.0
    %481 = vmatprep.subr.mxu0 0.0
    %482 = vmatpush1.msra.mxu0 0.0
    %483 = vmatprep.subr.mxu0 0.0
    %484 = vmatpush1.msra.mxu0 0.0
    %485 = vmatprep.mubr.f32.mxu0 0.0
    %486 = vmatmul.mubr.f32.gmra.mrb[0].mxu0 %v231
    %v487 = vpop.f32.mrb[0].mxu0
    %v488 = vadd.f32 0.0, %v487
    %v489 = vpop.f32.mrb[0].mxu0
    %490 = vdwg.mxu0
    %v491 = vadd.f32 %v191, %v488
    %v492 = vtanh.pop %v491
    %493 = vmatprep.subr.mxu0 0.0
    %494 = vmatpush1.msra.mxu0 %v232
    %495 = vmatprep.subr.mxu0 0.0
    %496 = vmatpush1.msra.mxu0 %v233
    %497 = vmatprep.subr.mxu0 0.0
    %498 = vmatpush1.msra.mxu0 %v234
    %499 = vmatprep.subr.mxu0 0.0
    %500 = vmatpush1.msra.mxu0 %v235
    %501 = vmatprep.subr.mxu0 0.0
    %502 = vmatpush1.msra.mxu0 %v236
    %503 = vmatprep.subr.mxu0 0.0
    %504 = vmatpush1.msra.mxu0 %v237
    %505 = vmatprep.subr.mxu0 0.0
    %506 = vmatpush1.msra.mxu0 %v238
    %507 = vmatprep.subr.mxu0 0.0
    %508 = vmatpush1.msra.mxu0 %v239
    %509 = vmatprep.subr.mxu0 0.0
    %510 = vmatpush1.msra.mxu0 %v240
    %511 = vmatprep.subr.mxu0 0.0
    %512 = vmatpush1.msra.mxu0 %v241
    %513 = vmatprep.subr.mxu0 0.0
    %514 = vmatpush1.msra.mxu0 %v242
    %515 = vmatprep.subr.mxu0 0.0
    %516 = vmatpush1.msra.mxu0 %v243
    %517 = vmatprep.subr.mxu0 0.0
    %518 = vmatpush1.msra.mxu0 %v244
    %519 = vmatprep.subr.mxu0 0.0
    %520 = vmatpush1.msra.mxu0 %v245
    %521 = vmatprep.subr.mxu0 0.0
    %522 = vmatpush1.msra.mxu0 %v246
    %523 = vmatprep.subr.mxu0 0.0
    %524 = vmatpush1.msra.mxu0 %v247
    %525 = vmatprep.subr.mxu0 0.0
    %526 = vmatpush1.msra.mxu0 0.0
    %527 = vmatprep.subr.mxu0 0.0
    %528 = vmatpush1.msra.mxu0 0.0
    %529 = vmatprep.subr.mxu0 0.0
    %530 = vmatpush1.msra.mxu0 0.0
    %531 = vmatprep.subr.mxu0 0.0
    %532 = vmatpush1.msra.mxu0 0.0
    %533 = vmatprep.subr.mxu0 0.0
    %534 = vmatpush1.msra.mxu0 0.0
    %535 = vmatprep.subr.mxu0 0.0
    %536 = vmatpush1.msra.mxu0 0.0
    %537 = vmatprep.subr.mxu0 0.0
    %538 = vmatpush1.msra.mxu0 0.0
    %539 = vmatprep.subr.mxu0 0.0
    %540 = vmatpush1.msra.mxu0 0.0
    %541 = vmatprep.subr.mxu0 0.0
    %542 = vmatpush1.msra.mxu0 0.0
    %543 = vmatprep.subr.mxu0 0.0
    %544 = vmatpush1.msra.mxu0 0.0
    %545 = vmatprep.subr.mxu0 0.0
    %546 = vmatpush1.msra.mxu0 0.0
    %547 = vmatprep.subr.mxu0 0.0
    %548 = vmatpush1.msra.mxu0 0.0
    %549 = vmatprep.subr.mxu0 0.0
    %550 = vmatpush1.msra.mxu0 0.0
    %551 = vmatprep.subr.mxu0 0.0
    %552 = vmatpush1.msra.mxu0 0.0
    %553 = vmatprep.subr.mxu0 0.0
    %554 = vmatpush1.msra.mxu0 0.0
    %555 = vmatprep.subr.mxu0 0.0
    %556 = vmatpush1.msra.mxu0 0.0
    %557 = vmatprep.mubr.f32.mxu0 0.0
    %558 = vmatmul.mubr.f32.gmra.mrb[0].mxu0 %v492
    %v559 = vpop.f32.mrb[0].mxu0
    %v560 = vadd.f32 %v402, %v559
    %v561 = vpop.f32.mrb[0].mxu0
    %562 = vdwg.mxu0
    %v563 = vadd.f32 %v560, %v229
    %v564 = vtanh.pop %v563
    %565 = vmatprep.subr.mxu0 0.0
    %566 = vmatpush1.msra.mxu0 %v319
    %567 = vmatprep.subr.mxu0 0.0
    %568 = vmatpush1.msra.mxu0 %v320
    %569 = vmatprep.subr.mxu0 0.0
    %570 = vmatpush1.msra.mxu0 %v321
    %571 = vmatprep.subr.mxu0 0.0
    %572 = vmatpush1.msra.mxu0 %v322
    %573 = vmatprep.subr.mxu0 0.0
    %574 = vmatpush1.msra.mxu0 %v323
    %575 = vmatprep.subr.mxu0 0.0
    %576 = vmatpush1.msra.mxu0 %v324
    %577 = vmatprep.subr.mxu0 0.0
    %578 = vmatpush1.msra.mxu0 %v325
    %579 = vmatprep.subr.mxu0 0.0
    %580 = vmatpush1.msra.mxu0 %v326
    %581 = vmatprep.subr.mxu0 0.0
    %582 = vmatpush1.msra.mxu0 %v327
    %583 = vmatprep.subr.mxu0 0.0
    %584 = vmatpush1.msra.mxu0 %v328
    %585 = vmatprep.subr.mxu0 0.0
    %586 = vmatpush1.msra.mxu0 %v329
    %587 = vmatprep.subr.mxu0 0.0
    %588 = vmatpush1.msra.mxu0 %v330
    %589 = vmatprep.subr.mxu0 0.0
    %590 = vmatpush1.msra.mxu0 %v331
    %591 = vmatprep.subr.mxu0 0.0
    %592 = vmatpush1.msra.mxu0 %v332
    %593 = vmatprep.subr.mxu0 0.0
    %594 = vmatpush1.msra.mxu0 %v333
    %595 = vmatprep.subr.mxu0 0.0
    %596 = vmatpush1.msra.mxu0 %v334
    %597 = vmatprep.subr.mxu0 0.0
    %598 = vmatpush1.msra.mxu0 0.0
    %599 = vmatprep.subr.mxu0 0.0
    %600 = vmatpush1.msra.mxu0 0.0
    %601 = vmatprep.subr.mxu0 0.0
    %602 = vmatpush1.msra.mxu0 0.0
    %603 = vmatprep.subr.mxu0 0.0
    %604 = vmatpush1.msra.mxu0 0.0
    %605 = vmatprep.subr.mxu0 0.0
    %606 = vmatpush1.msra.mxu0 0.0
    %607 = vmatprep.subr.mxu0 0.0
    %608 = vmatpush1.msra.mxu0 0.0
    %609 = vmatprep.subr.mxu0 0.0
    %610 = vmatpush1.msra.mxu0 0.0
    %611 = vmatprep.subr.mxu0 0.0
    %612 = vmatpush1.msra.mxu0 0.0
    %613 = vmatprep.subr.mxu0 0.0
    %614 = vmatpush1.msra.mxu0 0.0
    %615 = vmatprep.subr.mxu0 0.0
    %616 = vmatpush1.msra.mxu0 0.0
    %617 = vmatprep.subr.mxu0 0.0
    %618 = vmatpush1.msra.mxu0 0.0
    %619 = vmatprep.subr.mxu0 0.0
    %620 = vmatpush1.msra.mxu0 0.0
    %621 = vmatprep.subr.mxu0 0.0
    %622 = vmatpush1.msra.mxu0 0.0
    %623 = vmatprep.subr.mxu0 0.0
    %624 = vmatpush1.msra.mxu0 0.0
    %625 = vmatprep.subr.mxu0 0.0
    %626 = vmatpush1.msra.mxu0 0.0
    %627 = vmatprep.subr.mxu0 0.0
    %628 = vmatpush1.msra.mxu0 0.0
    %629 = vmatprep.mubr.f32.mxu0 0.0
    %630 = vmatmul.mubr.f32.gmra.mrb[0].mxu0 %v564
    %v631 = vpop.f32.mrb[0].mxu0
    %v632 = vadd.f32 0.0, %v631
    %v633 = vpop.f32.mrb[0].mxu0
    %634 = vdwg.mxu0
    %635 = vmatprep.subr.mxu0 0.0
    %636 = vmatpush1.msra.mxu0 %v405
    %637 = vmatprep.subr.mxu0 0.0
    %638 = vmatpush1.msra.mxu0 %v406
    %639 = vmatprep.subr.mxu0 0.0
    %640 = vmatpush1.msra.mxu0 %v407
    %641 = vmatprep.subr.mxu0 0.0
    %642 = vmatpush1.msra.mxu0 %v408
    %643 = vmatprep.subr.mxu0 0.0
    %644 = vmatpush1.msra.mxu0 %v409
    %645 = vmatprep.subr.mxu0 0.0
    %646 = vmatpush1.msra.mxu0 %v410
    %647 = vmatprep.subr.mxu0 0.0
    %648 = vmatpush1.msra.mxu0 %v411
    %649 = vmatprep.subr.mxu0 0.0
    %650 = vmatpush1.msra.mxu0 %v412
    %651 = vmatprep.subr.mxu0 0.0
    %652 = vmatpush1.msra.mxu0 %v413
    %653 = vmatprep.subr.mxu0 0.0
    %654 = vmatpush1.msra.mxu0 %v414
    %655 = vmatprep.subr.mxu0 0.0
    %656 = vmatpush1.msra.mxu0 %v415
    %657 = vmatprep.subr.mxu0 0.0
    %658 = vmatpush1.msra.mxu0 %v416
    %659 = vmatprep.subr.mxu0 0.0
    %660 = vmatpush1.msra.mxu0 %v417
    %661 = vmatprep.subr.mxu0 0.0
    %662 = vmatpush1.msra.mxu0 %v418
    %663 = vmatprep.subr.mxu0 0.0
    %664 = vmatpush1.msra.mxu0 %v419
    %665 = vmatprep.subr.mxu0 0.0
    %666 = vmatpush1.msra.mxu0 %v420
    %667 = vmatprep.subr.mxu0 0.0
    %668 = vmatpush1.msra.mxu0 0.0
    %669 = vmatprep.subr.mxu0 0.0
    %670 = vmatpush1.msra.mxu0 0.0
    %671 = vmatprep.subr.mxu0 0.0
    %672 = vmatpush1.msra.mxu0 0.0
    %673 = vmatprep.subr.mxu0 0.0
    %674 = vmatpush1.msra.mxu0 0.0
    %675 = vmatprep.subr.mxu0 0.0
    %676 = vmatpush1.msra.mxu0 0.0
    %677 = vmatprep.subr.mxu0 0.0
    %678 = vmatpush1.msra.mxu0 0.0
    %679 = vmatprep.subr.mxu0 0.0
    %680 = vmatpush1.msra.mxu0 0.0
    %681 = vmatprep.subr.mxu0 0.0
    %682 = vmatpush1.msra.mxu0 0.0
    %683 = vmatprep.subr.mxu0 0.0
    %684 = vmatpush1.msra.mxu0 0.0
    %685 = vmatprep.subr.mxu0 0.0
    %686 = vmatpush1.msra.mxu0 0.0
    %687 = vmatprep.subr.mxu0 0.0
    %688 = vmatpush1.msra.mxu0 0.0
    %689 = vmatprep.subr.mxu0 0.0
    %690 = vmatpush1.msra.mxu0 0.0
    %691 = vmatprep.subr.mxu0 0.0
    %692 = vmatpush1.msra.mxu0 0.0
    %693 = vmatprep.subr.mxu0 0.0
    %694 = vmatpush1.msra.mxu0 0.0
    %695 = vmatprep.subr.mxu0 0.0
    %696 = vmatpush1.msra.mxu0 0.0
    %697 = vmatprep.subr.mxu0 0.0
    %698 = vmatpush1.msra.mxu0 0.0
    %699 = vmatprep.mubr.f32.mxu0 0.0
    %700 = vmatmul.mubr.f32.gmra.mrb[0].mxu0 %v492
    %v701 = vpop.f32.mrb[0].mxu0
    %v702 = vadd.f32 0.0, %v701
    %v703 = vpop.f32.mrb[0].mxu0
    %704 = vdwg.mxu0
    %v705 = vadd.f32 %v196, %v702
    %v706 = vtanh.pop %v705
    %707 = vmatprep.subr.mxu0 0.0
    %708 = vmatpush1.msra.mxu0 %v232
    %709 = vmatprep.subr.mxu0 0.0
    %710 = vmatpush1.msra.mxu0 %v233
    %711 = vmatprep.subr.mxu0 0.0
    %712 = vmatpush1.msra.mxu0 %v234
    %713 = vmatprep.subr.mxu0 0.0
    %714 = vmatpush1.msra.mxu0 %v235
    %715 = vmatprep.subr.mxu0 0.0
    %716 = vmatpush1.msra.mxu0 %v236
    %717 = vmatprep.subr.mxu0 0.0
    %718 = vmatpush1.msra.mxu0 %v237
    %719 = vmatprep.subr.mxu0 0.0
    %720 = vmatpush1.msra.mxu0 %v238
    %721 = vmatprep.subr.mxu0 0.0
    %722 = vmatpush1.msra.mxu0 %v239
    %723 = vmatprep.subr.mxu0 0.0
    %724 = vmatpush1.msra.mxu0 %v240
    %725 = vmatprep.subr.mxu0 0.0
    %726 = vmatpush1.msra.mxu0 %v241
    %727 = vmatprep.subr.mxu0 0.0
    %728 = vmatpush1.msra.mxu0 %v242
    %729 = vmatprep.subr.mxu0 0.0
    %730 = vmatpush1.msra.mxu0 %v243
    %731 = vmatprep.subr.mxu0 0.0
    %732 = vmatpush1.msra.mxu0 %v244
    %733 = vmatprep.subr.mxu0 0.0
    %734 = vmatpush1.msra.mxu0 %v245
    %735 = vmatprep.subr.mxu0 0.0
    %736 = vmatpush1.msra.mxu0 %v246
    %737 = vmatprep.subr.mxu0 0.0
    %738 = vmatpush1.msra.mxu0 %v247
    %739 = vmatprep.subr.mxu0 0.0
    %740 = vmatpush1.msra.mxu0 0.0
    %741 = vmatprep.subr.mxu0 0.0
    %742 = vmatpush1.msra.mxu0 0.0
    %743 = vmatprep.subr.mxu0 0.0
    %744 = vmatpush1.msra.mxu0 0.0
    %745 = vmatprep.subr.mxu0 0.0
    %746 = vmatpush1.msra.mxu0 0.0
    %747 = vmatprep.subr.mxu0 0.0
    %748 = vmatpush1.msra.mxu0 0.0
    %749 = vmatprep.subr.mxu0 0.0
    %750 = vmatpush1.msra.mxu0 0.0
    %751 = vmatprep.subr.mxu0 0.0
    %752 = vmatpush1.msra.mxu0 0.0
    %753 = vmatprep.subr.mxu0 0.0
    %754 = vmatpush1.msra.mxu0 0.0
    %755 = vmatprep.subr.mxu0 0.0
    %756 = vmatpush1.msra.mxu0 0.0
    %757 = vmatprep.subr.mxu0 0.0
    %758 = vmatpush1.msra.mxu0 0.0
    %759 = vmatprep.subr.mxu0 0.0
    %760 = vmatpush1.msra.mxu0 0.0
    %761 = vmatprep.subr.mxu0 0.0
    %762 = vmatpush1.msra.mxu0 0.0
    %763 = vmatprep.subr.mxu0 0.0
    %764 = vmatpush1.msra.mxu0 0.0
    %765 = vmatprep.subr.mxu0 0.0
    %766 = vmatpush1.msra.mxu0 0.0
    %767 = vmatprep.subr.mxu0 0.0
    %768 = vmatpush1.msra.mxu0 0.0
    %769 = vmatprep.subr.mxu0 0.0
    %770 = vmatpush1.msra.mxu0 0.0
    %771 = vmatprep.mubr.f32.mxu0 0.0
    %772 = vmatmul.mubr.f32.gmra.mrb[0].mxu0 %v706
    %v773 = vpop.f32.mrb[0].mxu0
    %v774 = vadd.f32 %v632, %v773
    %v775 = vpop.f32.mrb[0].mxu0
    %776 = vdwg.mxu0
    %v777 = vadd.f32 %v774, %v229
    %v778 = vtanh.pop %v777
    %779 = vmatprep.subr.mxu0 0.0
    %780 = vmatpush1.msra.mxu0 %v319
    %781 = vmatprep.subr.mxu0 0.0
    %782 = vmatpush1.msra.mxu0 %v320
    %783 = vmatprep.subr.mxu0 0.0
    %784 = vmatpush1.msra.mxu0 %v321
    %785 = vmatprep.subr.mxu0 0.0
    %786 = vmatpush1.msra.mxu0 %v322
    %787 = vmatprep.subr.mxu0 0.0
    %788 = vmatpush1.msra.mxu0 %v323
    %789 = vmatprep.subr.mxu0 0.0
    %790 = vmatpush1.msra.mxu0 %v324
    %791 = vmatprep.subr.mxu0 0.0
    %792 = vmatpush1.msra.mxu0 %v325
    %793 = vmatprep.subr.mxu0 0.0
    %794 = vmatpush1.msra.mxu0 %v326
    %795 = vmatprep.subr.mxu0 0.0
    %796 = vmatpush1.msra.mxu0 %v327
    %797 = vmatprep.subr.mxu0 0.0
    %798 = vmatpush1.msra.mxu0 %v328
    %799 = vmatprep.subr.mxu0 0.0
    %800 = vmatpush1.msra.mxu0 %v329
    %801 = vmatprep.subr.mxu0 0.0
    %802 = vmatpush1.msra.mxu0 %v330
    %803 = vmatprep.subr.mxu0 0.0
    %804 = vmatpush1.msra.mxu0 %v331
    %805 = vmatprep.subr.mxu0 0.0
    %806 = vmatpush1.msra.mxu0 %v332
    %807 = vmatprep.subr.mxu0 0.0
    %808 = vmatpush1.msra.mxu0 %v333
    %809 = vmatprep.subr.mxu0 0.0
    %810 = vmatpush1.msra.mxu0 %v334
    %811 = vmatprep.subr.mxu0 0.0
    %812 = vmatpush1.msra.mxu0 0.0
    %813 = vmatprep.subr.mxu0 0.0
    %814 = vmatpush1.msra.mxu0 0.0
    %815 = vmatprep.subr.mxu0 0.0
    %816 = vmatpush1.msra.mxu0 0.0
    %817 = vmatprep.subr.mxu0 0.0
    %818 = vmatpush1.msra.mxu0 0.0
    %819 = vmatprep.subr.mxu0 0.0
    %820 = vmatpush1.msra.mxu0 0.0
    %821 = vmatprep.subr.mxu0 0.0
    %822 = vmatpush1.msra.mxu0 0.0
    %823 = vmatprep.subr.mxu0 0.0
    %824 = vmatpush1.msra.mxu0 0.0
    %825 = vmatprep.subr.mxu0 0.0
    %826 = vmatpush1.msra.mxu0 0.0
    %827 = vmatprep.subr.mxu0 0.0
    %828 = vmatpush1.msra.mxu0 0.0
    %829 = vmatprep.subr.mxu0 0.0
    %830 = vmatpush1.msra.mxu0 0.0
    %831 = vmatprep.subr.mxu0 0.0
    %832 = vmatpush1.msra.mxu0 0.0
    %833 = vmatprep.subr.mxu0 0.0
    %834 = vmatpush1.msra.mxu0 0.0
    %835 = vmatprep.subr.mxu0 0.0
    %836 = vmatpush1.msra.mxu0 0.0
    %837 = vmatprep.subr.mxu0 0.0
    %838 = vmatpush1.msra.mxu0 0.0
    %839 = vmatprep.subr.mxu0 0.0
    %840 = vmatpush1.msra.mxu0 0.0
    %841 = vmatprep.subr.mxu0 0.0
    %842 = vmatpush1.msra.mxu0 0.0
    %843 = vmatprep.mubr.f32.mxu0 0.0
    %844 = vmatmul.mubr.f32.gmra.mrb[0].mxu0 %v778
    %v845 = vpop.f32.mrb[0].mxu0
    %v846 = vadd.f32 0.0, %v845
    %v847 = vpop.f32.mrb[0].mxu0
    %848 = vdwg.mxu0
    %849 = vmatprep.subr.mxu0 0.0
    %850 = vmatpush1.msra.mxu0 %v405
    %851 = vmatprep.subr.mxu0 0.0
    %852 = vmatpush1.msra.mxu0 %v406
    %853 = vmatprep.subr.mxu0 0.0
    %854 = vmatpush1.msra.mxu0 %v407
    %855 = vmatprep.subr.mxu0 0.0
    %856 = vmatpush1.msra.mxu0 %v408
    %857 = vmatprep.subr.mxu0 0.0
    %858 = vmatpush1.msra.mxu0 %v409
    %859 = vmatprep.subr.mxu0 0.0
    %860 = vmatpush1.msra.mxu0 %v410
    %861 = vmatprep.subr.mxu0 0.0
    %862 = vmatpush1.msra.mxu0 %v411
    %863 = vmatprep.subr.mxu0 0.0
    %864 = vmatpush1.msra.mxu0 %v412
    %865 = vmatprep.subr.mxu0 0.0
    %866 = vmatpush1.msra.mxu0 %v413
    %867 = vmatprep.subr.mxu0 0.0
    %868 = vmatpush1.msra.mxu0 %v414
    %869 = vmatprep.subr.mxu0 0.0
    %870 = vmatpush1.msra.mxu0 %v415
    %871 = vmatprep.subr.mxu0 0.0
    %872 = vmatpush1.msra.mxu0 %v416
    %873 = vmatprep.subr.mxu0 0.0
    %874 = vmatpush1.msra.mxu0 %v417
    %875 = vmatprep.subr.mxu0 0.0
    %876 = vmatpush1.msra.mxu0 %v418
    %877 = vmatprep.subr.mxu0 0.0
    %878 = vmatpush1.msra.mxu0 %v419
    %879 = vmatprep.subr.mxu0 0.0
    %880 = vmatpush1.msra.mxu0 %v420
    %881 = vmatprep.subr.mxu0 0.0
    %882 = vmatpush1.msra.mxu0 0.0
    %883 = vmatprep.subr.mxu0 0.0
    %884 = vmatpush1.msra.mxu0 0.0
    %885 = vmatprep.subr.mxu0 0.0
    %886 = vmatpush1.msra.mxu0 0.0
    %887 = vmatprep.subr.mxu0 0.0
    %888 = vmatpush1.msra.mxu0 0.0
    %889 = vmatprep.subr.mxu0 0.0
    %890 = vmatpush1.msra.mxu0 0.0
    %891 = vmatprep.subr.mxu0 0.0
    %892 = vmatpush1.msra.mxu0 0.0
    %893 = vmatprep.subr.mxu0 0.0
    %894 = vmatpush1.msra.mxu0 0.0
    %895 = vmatprep.subr.mxu0 0.0
    %896 = vmatpush1.msra.mxu0 0.0
    %897 = vmatprep.subr.mxu0 0.0
    %898 = vmatpush1.msra.mxu0 0.0
    %899 = vmatprep.subr.mxu0 0.0
    %900 = vmatpush1.msra.mxu0 0.0
    %901 = vmatprep.subr.mxu0 0.0
    %902 = vmatpush1.msra.mxu0 0.0
    %903 = vmatprep.subr.mxu0 0.0
    %904 = vmatpush1.msra.mxu0 0.0
    %905 = vmatprep.subr.mxu0 0.0
    %906 = vmatpush1.msra.mxu0 0.0
    %907 = vmatprep.subr.mxu0 0.0
    %908 = vmatpush1.msra.mxu0 0.0
    %909 = vmatprep.subr.mxu0 0.0
    %910 = vmatpush1.msra.mxu0 0.0
    %911 = vmatprep.subr.mxu0 0.0
    %912 = vmatpush1.msra.mxu0 0.0
    %913 = vmatprep.mubr.f32.mxu0 0.0
    %914 = vmatmul.mubr.f32.gmra.mrb[0].mxu0 %v706
    %v915 = vpop.f32.mrb[0].mxu0
    %v916 = vadd.f32 0.0, %v915
    %v917 = vpop.f32.mrb[0].mxu0
    %918 = vdwg.mxu0
    %v919 = vadd.f32 %v201, %v916
    %v920 = vtanh.pop %v919
    %921 = vmatprep.subr.mxu0 0.0
    %922 = vmatpush1.msra.mxu0 %v232
    %923 = vmatprep.subr.mxu0 0.0
    %924 = vmatpush1.msra.mxu0 %v233
    %925 = vmatprep.subr.mxu0 0.0
    %926 = vmatpush1.msra.mxu0 %v234
    %927 = vmatprep.subr.mxu0 0.0
    %928 = vmatpush1.msra.mxu0 %v235
    %929 = vmatprep.subr.mxu0 0.0
    %930 = vmatpush1.msra.mxu0 %v236
    %931 = vmatprep.subr.mxu0 0.0
    %932 = vmatpush1.msra.mxu0 %v237
    %933 = vmatprep.subr.mxu0 0.0
    %934 = vmatpush1.msra.mxu0 %v238
    %935 = vmatprep.subr.mxu0 0.0
    %936 = vmatpush1.msra.mxu0 %v239
    %937 = vmatprep.subr.mxu0 0.0
    %938 = vmatpush1.msra.mxu0 %v240
    %939 = vmatprep.subr.mxu0 0.0
    %940 = vmatpush1.msra.mxu0 %v241
    %941 = vmatprep.subr.mxu0 0.0
    %942 = vmatpush1.msra.mxu0 %v242
    %943 = vmatprep.subr.mxu0 0.0
    %944 = vmatpush1.msra.mxu0 %v243
    %945 = vmatprep.subr.mxu0 0.0
    %946 = vmatpush1.msra.mxu0 %v244
    %947 = vmatprep.subr.mxu0 0.0
    %948 = vmatpush1.msra.mxu0 %v245
    %949 = vmatprep.subr.mxu0 0.0
    %950 = vmatpush1.msra.mxu0 %v246
    %951 = vmatprep.subr.mxu0 0.0
    %952 = vmatpush1.msra.mxu0 %v247
    %953 = vmatprep.subr.mxu0 0.0
    %954 = vmatpush1.msra.mxu0 0.0
    %955 = vmatprep.subr.mxu0 0.0
    %956 = vmatpush1.msra.mxu0 0.0
    %957 = vmatprep.subr.mxu0 0.0
    %958 = vmatpush1.msra.mxu0 0.0
    %959 = vmatprep.subr.mxu0 0.0
    %960 = vmatpush1.msra.mxu0 0.0
    %961 = vmatprep.subr.mxu0 0.0
    %962 = vmatpush1.msra.mxu0 0.0
    %963 = vmatprep.subr.mxu0 0.0
    %964 = vmatpush1.msra.mxu0 0.0
    %965 = vmatprep.subr.mxu0 0.0
    %966 = vmatpush1.msra.mxu0 0.0
    %967 = vmatprep.subr.mxu0 0.0
    %968 = vmatpush1.msra.mxu0 0.0
    %969 = vmatprep.subr.mxu0 0.0
    %970 = vmatpush1.msra.mxu0 0.0
    %971 = vmatprep.subr.mxu0 0.0
    %972 = vmatpush1.msra.mxu0 0.0
    %973 = vmatprep.subr.mxu0 0.0
    %974 = vmatpush1.msra.mxu0 0.0
    %975 = vmatprep.subr.mxu0 0.0
    %976 = vmatpush1.msra.mxu0 0.0
    %977 = vmatprep.subr.mxu0 0.0
    %978 = vmatpush1.msra.mxu0 0.0
    %979 = vmatprep.subr.mxu0 0.0
    %980 = vmatpush1.msra.mxu0 0.0
    %981 = vmatprep.subr.mxu0 0.0
    %982 = vmatpush1.msra.mxu0 0.0
    %983 = vmatprep.subr.mxu0 0.0
    %984 = vmatpush1.msra.mxu0 0.0
    %985 = vmatprep.mubr.f32.mxu0 0.0
    %986 = vmatmul.mubr.f32.gmra.mrb[0].mxu0 %v920
    %v987 = vpop.f32.mrb[0].mxu0
    %v988 = vadd.f32 %v846, %v987
    %v989 = vpop.f32.mrb[0].mxu0
    %990 = vdwg.mxu0
    %v991 = vadd.f32 %v988, %v229
    %v992 = vtanh.pop %v991
    %993 = vmatprep.subr.mxu0 0.0
    %994 = vmatpush1.msra.mxu0 %v319
    %995 = vmatprep.subr.mxu0 0.0
    %996 = vmatpush1.msra.mxu0 %v320
    %997 = vmatprep.subr.mxu0 0.0
    %998 = vmatpush1.msra.mxu0 %v321
    %999 = vmatprep.subr.mxu0 0.0
    %1000 = vmatpush1.msra.mxu0 %v322
    %1001 = vmatprep.subr.mxu0 0.0
    %1002 = vmatpush1.msra.mxu0 %v323
    %1003 = vmatprep.subr.mxu0 0.0
    %1004 = vmatpush1.msra.mxu0 %v324
    %1005 = vmatprep.subr.mxu0 0.0
    %1006 = vmatpush1.msra.mxu0 %v325
    %1007 = vmatprep.subr.mxu0 0.0
    %1008 = vmatpush1.msra.mxu0 %v326
    %1009 = vmatprep.subr.mxu0 0.0
    %1010 = vmatpush1.msra.mxu0 %v327
    %1011 = vmatprep.subr.mxu0 0.0
    %1012 = vmatpush1.msra.mxu0 %v328
    %1013 = vmatprep.subr.mxu0 0.0
    %1014 = vmatpush1.msra.mxu0 %v329
    %1015 = vmatprep.subr.mxu0 0.0
    %1016 = vmatpush1.msra.mxu0 %v330
    %1017 = vmatprep.subr.mxu0 0.0
    %1018 = vmatpush1.msra.mxu0 %v331
    %1019 = vmatprep.subr.mxu0 0.0
    %1020 = vmatpush1.msra.mxu0 %v332
    %1021 = vmatprep.subr.mxu0 0.0
    %1022 = vmatpush1.msra.mxu0 %v333
    %1023 = vmatprep.subr.mxu0 0.0
    %1024 = vmatpush1.msra.mxu0 %v334
    %1025 = vmatprep.subr.mxu0 0.0
    %1026 = vmatpush1.msra.mxu0 0.0
    %1027 = vmatprep.subr.mxu0 0.0
    %1028 = vmatpush1.msra.mxu0 0.0
    %1029 = vmatprep.subr.mxu0 0.0
    %1030 = vmatpush1.msra.mxu0 0.0
    %1031 = vmatprep.subr.mxu0 0.0
    %1032 = vmatpush1.msra.mxu0 0.0
    %1033 = vmatprep.subr.mxu0 0.0
    %1034 = vmatpush1.msra.mxu0 0.0
    %1035 = vmatprep.subr.mxu0 0.0
    %1036 = vmatpush1.msra.mxu0 0.0
    %1037 = vmatprep.subr.mxu0 0.0
    %1038 = vmatpush1.msra.mxu0 0.0
    %1039 = vmatprep.subr.mxu0 0.0
    %1040 = vmatpush1.msra.mxu0 0.0
    %1041 = vmatprep.subr.mxu0 0.0
    %1042 = vmatpush1.msra.mxu0 0.0
    %1043 = vmatprep.subr.mxu0 0.0
    %1044 = vmatpush1.msra.mxu0 0.0
    %1045 = vmatprep.subr.mxu0 0.0
    %1046 = vmatpush1.msra.mxu0 0.0
    %1047 = vmatprep.subr.mxu0 0.0
    %1048 = vmatpush1.msra.mxu0 0.0
    %1049 = vmatprep.subr.mxu0 0.0
    %1050 = vmatpush1.msra.mxu0 0.0
    %1051 = vmatprep.subr.mxu0 0.0
    %1052 = vmatpush1.msra.mxu0 0.0
    %1053 = vmatprep.subr.mxu0 0.0
    %1054 = vmatpush1.msra.mxu0 0.0
    %1055 = vmatprep.subr.mxu0 0.0
    %1056 = vmatpush1.msra.mxu0 0.0
    %1057 = vmatprep.mubr.f32.mxu0 0.0
    %1058 = vmatmul.mubr.f32.gmra.mrb[0].mxu0 %v992
    %v1059 = vpop.f32.mrb[0].mxu0
    %v1060 = vadd.f32 0.0, %v1059
    %v1061 = vpop.f32.mrb[0].mxu0
    %1062 = vdwg.mxu0
    %1063 = vmatprep.subr.mxu0 0.0
    %1064 = vmatpush1.msra.mxu0 %v405
    %1065 = vmatprep.subr.mxu0 0.0
    %1066 = vmatpush1.msra.mxu0 %v406
    %1067 = vmatprep.subr.mxu0 0.0
    %1068 = vmatpush1.msra.mxu0 %v407
    %1069 = vmatprep.subr.mxu0 0.0
    %1070 = vmatpush1.msra.mxu0 %v408
    %1071 = vmatprep.subr.mxu0 0.0
    %1072 = vmatpush1.msra.mxu0 %v409
    %1073 = vmatprep.subr.mxu0 0.0
    %1074 = vmatpush1.msra.mxu0 %v410
    %1075 = vmatprep.subr.mxu0 0.0
    %1076 = vmatpush1.msra.mxu0 %v411
    %1077 = vmatprep.subr.mxu0 0.0
    %1078 = vmatpush1.msra.mxu0 %v412
    %1079 = vmatprep.subr.mxu0 0.0
    %1080 = vmatpush1.msra.mxu0 %v413
    %1081 = vmatprep.subr.mxu0 0.0
    %1082 = vmatpush1.msra.mxu0 %v414
    %1083 = vmatprep.subr.mxu0 0.0
    %1084 = vmatpush1.msra.mxu0 %v415
    %1085 = vmatprep.subr.mxu0 0.0
    %1086 = vmatpush1.msra.mxu0 %v416
    %1087 = vmatprep.subr.mxu0 0.0
    %1088 = vmatpush1.msra.mxu0 %v417
    %1089 = vmatprep.subr.mxu0 0.0
    %1090 = vmatpush1.msra.mxu0 %v418
    %1091 = vmatprep.subr.mxu0 0.0
    %1092 = vmatpush1.msra.mxu0 %v419
    %1093 = vmatprep.subr.mxu0 0.0
    %1094 = vmatpush1.msra.mxu0 %v420
    %1095 = vmatprep.subr.mxu0 0.0
    %1096 = vmatpush1.msra.mxu0 0.0
    %1097 = vmatprep.subr.mxu0 0.0
    %1098 = vmatpush1.msra.mxu0 0.0
    %1099 = vmatprep.subr.mxu0 0.0
    %1100 = vmatpush1.msra.mxu0 0.0
    %1101 = vmatprep.subr.mxu0 0.0
    %1102 = vmatpush1.msra.mxu0 0.0
    %1103 = vmatprep.subr.mxu0 0.0
    %1104 = vmatpush1.msra.mxu0 0.0
    %1105 = vmatprep.subr.mxu0 0.0
    %1106 = vmatpush1.msra.mxu0 0.0
    %1107 = vmatprep.subr.mxu0 0.0
    %1108 = vmatpush1.msra.mxu0 0.0
    %1109 = vmatprep.subr.mxu0 0.0
    %1110 = vmatpush1.msra.mxu0 0.0
    %1111 = vmatprep.subr.mxu0 0.0
    %1112 = vmatpush1.msra.mxu0 0.0
    %1113 = vmatprep.subr.mxu0 0.0
    %1114 = vmatpush1.msra.mxu0 0.0
    %1115 = vmatprep.subr.mxu0 0.0
    %1116 = vmatpush1.msra.mxu0 0.0
    %1117 = vmatprep.subr.mxu0 0.0
    %1118 = vmatpush1.msra.mxu0 0.0
    %1119 = vmatprep.subr.mxu0 0.0
    %1120 = vmatpush1.msra.mxu0 0.0
    %1121 = vmatprep.subr.mxu0 0.0
    %1122 = vmatpush1.msra.mxu0 0.0
    %1123 = vmatprep.subr.mxu0 0.0
    %1124 = vmatpush1.msra.mxu0 0.0
    %1125 = vmatprep.subr.mxu0 0.0
    %1126 = vmatpush1.msra.mxu0 0.0
    %1127 = vmatprep.mubr.f32.mxu0 0.0
    %1128 = vmatmul.mubr.f32.gmra.mrb[0].mxu0 %v920
    %v1129 = vpop.f32.mrb[0].mxu0
    %v1130 = vadd.f32 0.0, %v1129
    %v1131 = vpop.f32.mrb[0].mxu0
    %1132 = vdwg.mxu0
    %v1133 = vadd.f32 %v206, %v1130
    %v1134 = vtanh.pop %v1133
    %1135 = vmatprep.subr.mxu0 0.0
    %1136 = vmatpush1.msra.mxu0 %v232
    %1137 = vmatprep.subr.mxu0 0.0
    %1138 = vmatpush1.msra.mxu0 %v233
    %1139 = vmatprep.subr.mxu0 0.0
    %1140 = vmatpush1.msra.mxu0 %v234
    %1141 = vmatprep.subr.mxu0 0.0
    %1142 = vmatpush1.msra.mxu0 %v235
    %1143 = vmatprep.subr.mxu0 0.0
    %1144 = vmatpush1.msra.mxu0 %v236
    %1145 = vmatprep.subr.mxu0 0.0
    %1146 = vmatpush1.msra.mxu0 %v237
    %1147 = vmatprep.subr.mxu0 0.0
    %1148 = vmatpush1.msra.mxu0 %v238
    %1149 = vmatprep.subr.mxu0 0.0
    %1150 = vmatpush1.msra.mxu0 %v239
    %1151 = vmatprep.subr.mxu0 0.0
    %1152 = vmatpush1.msra.mxu0 %v240
    %1153 = vmatprep.subr.mxu0 0.0
    %1154 = vmatpush1.msra.mxu0 %v241
    %1155 = vmatprep.subr.mxu0 0.0
    %1156 = vmatpush1.msra.mxu0 %v242
    %1157 = vmatprep.subr.mxu0 0.0
    %1158 = vmatpush1.msra.mxu0 %v243
    %1159 = vmatprep.subr.mxu0 0.0
    %1160 = vmatpush1.msra.mxu0 %v244
    %1161 = vmatprep.subr.mxu0 0.0
    %1162 = vmatpush1.msra.mxu0 %v245
    %1163 = vmatprep.subr.mxu0 0.0
    %1164 = vmatpush1.msra.mxu0 %v246
    %1165 = vmatprep.subr.mxu0 0.0
    %1166 = vmatpush1.msra.mxu0 %v247
    %1167 = vmatprep.subr.mxu0 0.0
    %1168 = vmatpush1.msra.mxu0 0.0
    %1169 = vmatprep.subr.mxu0 0.0
    %1170 = vmatpush1.msra.mxu0 0.0
    %1171 = vmatprep.subr.mxu0 0.0
    %1172 = vmatpush1.msra.mxu0 0.0
    %1173 = vmatprep.subr.mxu0 0.0
    %1174 = vmatpush1.msra.mxu0 0.0
    %1175 = vmatprep.subr.mxu0 0.0
    %1176 = vmatpush1.msra.mxu0 0.0
    %1177 = vmatprep.subr.mxu0 0.0
    %1178 = vmatpush1.msra.mxu0 0.0
    %1179 = vmatprep.subr.mxu0 0.0
    %1180 = vmatpush1.msra.mxu0 0.0
    %1181 = vmatprep.subr.mxu0 0.0
    %1182 = vmatpush1.msra.mxu0 0.0
    %1183 = vmatprep.subr.mxu0 0.0
    %1184 = vmatpush1.msra.mxu0 0.0
    %1185 = vmatprep.subr.mxu0 0.0
    %1186 = vmatpush1.msra.mxu0 0.0
    %1187 = vmatprep.subr.mxu0 0.0
    %1188 = vmatpush1.msra.mxu0 0.0
    %1189 = vmatprep.subr.mxu0 0.0
    %1190 = vmatpush1.msra.mxu0 0.0
    %1191 = vmatprep.subr.mxu0 0.0
    %1192 = vmatpush1.msra.mxu0 0.0
    %1193 = vmatprep.subr.mxu0 0.0
    %1194 = vmatpush1.msra.mxu0 0.0
    %1195 = vmatprep.subr.mxu0 0.0
    %1196 = vmatpush1.msra.mxu0 0.0
    %1197 = vmatprep.subr.mxu0 0.0
    %1198 = vmatpush1.msra.mxu0 0.0
    %1199 = vmatprep.mubr.f32.mxu0 0.0
    %1200 = vmatmul.mubr.f32.gmra.mrb[0].mxu0 %v1134
    %v1201 = vpop.f32.mrb[0].mxu0
    %v1202 = vadd.f32 %v1060, %v1201
    %v1203 = vpop.f32.mrb[0].mxu0
    %1204 = vdwg.mxu0
    %v1205 = vadd.f32 %v1202, %v229
    %v1206 = vtanh.pop %v1205
    %1207 = vmatprep.subr.mxu0 0.0
    %1208 = vmatpush1.msra.mxu0 %v319
    %1209 = vmatprep.subr.mxu0 0.0
    %1210 = vmatpush1.msra.mxu0 %v320
    %1211 = vmatprep.subr.mxu0 0.0
    %1212 = vmatpush1.msra.mxu0 %v321
    %1213 = vmatprep.subr.mxu0 0.0
    %1214 = vmatpush1.msra.mxu0 %v322
    %1215 = vmatprep.subr.mxu0 0.0
    %1216 = vmatpush1.msra.mxu0 %v323
    %1217 = vmatprep.subr.mxu0 0.0
    %1218 = vmatpush1.msra.mxu0 %v324
    %1219 = vmatprep.subr.mxu0 0.0
    %1220 = vmatpush1.msra.mxu0 %v325
    %1221 = vmatprep.subr.mxu0 0.0
    %1222 = vmatpush1.msra.mxu0 %v326
    %1223 = vmatprep.subr.mxu0 0.0
    %1224 = vmatpush1.msra.mxu0 %v327
    %1225 = vmatprep.subr.mxu0 0.0
    %1226 = vmatpush1.msra.mxu0 %v328
    %1227 = vmatprep.subr.mxu0 0.0
    %1228 = vmatpush1.msra.mxu0 %v329
    %1229 = vmatprep.subr.mxu0 0.0
    %1230 = vmatpush1.msra.mxu0 %v330
    %1231 = vmatprep.subr.mxu0 0.0
    %1232 = vmatpush1.msra.mxu0 %v331
    %1233 = vmatprep.subr.mxu0 0.0
    %1234 = vmatpush1.msra.mxu0 %v332
    %1235 = vmatprep.subr.mxu0 0.0
    %1236 = vmatpush1.msra.mxu0 %v333
    %1237 = vmatprep.subr.mxu0 0.0
    %1238 = vmatpush1.msra.mxu0 %v334
    %1239 = vmatprep.subr.mxu0 0.0
    %1240 = vmatpush1.msra.mxu0 0.0
    %1241 = vmatprep.subr.mxu0 0.0
    %1242 = vmatpush1.msra.mxu0 0.0
    %1243 = vmatprep.subr.mxu0 0.0
    %1244 = vmatpush1.msra.mxu0 0.0
    %1245 = vmatprep.subr.mxu0 0.0
    %1246 = vmatpush1.msra.mxu0 0.0
    %1247 = vmatprep.subr.mxu0 0.0
    %1248 = vmatpush1.msra.mxu0 0.0
    %1249 = vmatprep.subr.mxu0 0.0
    %1250 = vmatpush1.msra.mxu0 0.0
    %1251 = vmatprep.subr.mxu0 0.0
    %1252 = vmatpush1.msra.mxu0 0.0
    %1253 = vmatprep.subr.mxu0 0.0
    %1254 = vmatpush1.msra.mxu0 0.0
    %1255 = vmatprep.subr.mxu0 0.0
    %1256 = vmatpush1.msra.mxu0 0.0
    %1257 = vmatprep.subr.mxu0 0.0
    %1258 = vmatpush1.msra.mxu0 0.0
    %1259 = vmatprep.subr.mxu0 0.0
    %1260 = vmatpush1.msra.mxu0 0.0
    %1261 = vmatprep.subr.mxu0 0.0
    %1262 = vmatpush1.msra.mxu0 0.0
    %1263 = vmatprep.subr.mxu0 0.0
    %1264 = vmatpush1.msra.mxu0 0.0
    %1265 = vmatprep.subr.mxu0 0.0
    %1266 = vmatpush1.msra.mxu0 0.0
    %1267 = vmatprep.subr.mxu0 0.0
    %1268 = vmatpush1.msra.mxu0 0.0
    %1269 = vmatprep.subr.mxu0 0.0
    %1270 = vmatpush1.msra.mxu0 0.0
    %1271 = vmatprep.mubr.f32.mxu0 0.0
    %1272 = vmatmul.mubr.f32.gmra.mrb[0].mxu0 %v1206
    %v1273 = vpop.f32.mrb[0].mxu0
    %v1274 = vadd.f32 0.0, %v1273
    %v1275 = vpop.f32.mrb[0].mxu0
    %1276 = vdwg.mxu0
    %1277 = vmatprep.subr.mxu0 0.0
    %1278 = vmatpush1.msra.mxu0 %v405
    %1279 = vmatprep.subr.mxu0 0.0
    %1280 = vmatpush1.msra.mxu0 %v406
    %1281 = vmatprep.subr.mxu0 0.0
    %1282 = vmatpush1.msra.mxu0 %v407
    %1283 = vmatprep.subr.mxu0 0.0
    %1284 = vmatpush1.msra.mxu0 %v408
    %1285 = vmatprep.subr.mxu0 0.0
    %1286 = vmatpush1.msra.mxu0 %v409
    %1287 = vmatprep.subr.mxu0 0.0
    %1288 = vmatpush1.msra.mxu0 %v410
    %1289 = vmatprep.subr.mxu0 0.0
    %1290 = vmatpush1.msra.mxu0 %v411
    %1291 = vmatprep.subr.mxu0 0.0
    %1292 = vmatpush1.msra.mxu0 %v412
    %1293 = vmatprep.subr.mxu0 0.0
    %1294 = vmatpush1.msra.mxu0 %v413
    %1295 = vmatprep.subr.mxu0 0.0
    %1296 = vmatpush1.msra.mxu0 %v414
    %1297 = vmatprep.subr.mxu0 0.0
    %1298 = vmatpush1.msra.mxu0 %v415
    %1299 = vmatprep.subr.mxu0 0.0
    %1300 = vmatpush1.msra.mxu0 %v416
    %1301 = vmatprep.subr.mxu0 0.0
    %1302 = vmatpush1.msra.mxu0 %v417
    %1303 = vmatprep.subr.mxu0 0.0
    %1304 = vmatpush1.msra.mxu0 %v418
    %1305 = vmatprep.subr.mxu0 0.0
    %1306 = vmatpush1.msra.mxu0 %v419
    %1307 = vmatprep.subr.mxu0 0.0
    %1308 = vmatpush1.msra.mxu0 %v420
    %1309 = vmatprep.subr.mxu0 0.0
    %1310 = vmatpush1.msra.mxu0 0.0
    %1311 = vmatprep.subr.mxu0 0.0
    %1312 = vmatpush1.msra.mxu0 0.0
    %1313 = vmatprep.subr.mxu0 0.0
    %1314 = vmatpush1.msra.mxu0 0.0
    %1315 = vmatprep.subr.mxu0 0.0
    %1316 = vmatpush1.msra.mxu0 0.0
    %1317 = vmatprep.subr.mxu0 0.0
    %1318 = vmatpush1.msra.mxu0 0.0
    %1319 = vmatprep.subr.mxu0 0.0
    %1320 = vmatpush1.msra.mxu0 0.0
    %1321 = vmatprep.subr.mxu0 0.0
    %1322 = vmatpush1.msra.mxu0 0.0
    %1323 = vmatprep.subr.mxu0 0.0
    %1324 = vmatpush1.msra.mxu0 0.0
    %1325 = vmatprep.subr.mxu0 0.0
    %1326 = vmatpush1.msra.mxu0 0.0
    %1327 = vmatprep.subr.mxu0 0.0
    %1328 = vmatpush1.msra.mxu0 0.0
    %1329 = vmatprep.subr.mxu0 0.0
    %1330 = vmatpush1.msra.mxu0 0.0
    %1331 = vmatprep.subr.mxu0 0.0
    %1332 = vmatpush1.msra.mxu0 0.0
    %1333 = vmatprep.subr.mxu0 0.0
    %1334 = vmatpush1.msra.mxu0 0.0
    %1335 = vmatprep.subr.mxu0 0.0
    %1336 = vmatpush1.msra.mxu0 0.0
    %1337 = vmatprep.subr.mxu0 0.0
    %1338 = vmatpush1.msra.mxu0 0.0
    %1339 = vmatprep.subr.mxu0 0.0
    %1340 = vmatpush1.msra.mxu0 0.0
    %1341 = vmatprep.mubr.f32.mxu0 0.0
    %1342 = vmatmul.mubr.f32.gmra.mrb[0].mxu0 %v1134
    %v1343 = vpop.f32.mrb[0].mxu0
    %v1344 = vadd.f32 0.0, %v1343
    %v1345 = vpop.f32.mrb[0].mxu0
    %1346 = vdwg.mxu0
    %v1347 = vadd.f32 %v211, %v1344
    %v1348 = vtanh.pop %v1347
    %1349 = vmatprep.subr.mxu0 0.0
    %1350 = vmatpush1.msra.mxu0 %v232
    %1351 = vmatprep.subr.mxu0 0.0
    %1352 = vmatpush1.msra.mxu0 %v233
    %1353 = vmatprep.subr.mxu0 0.0
    %1354 = vmatpush1.msra.mxu0 %v234
    %1355 = vmatprep.subr.mxu0 0.0
    %1356 = vmatpush1.msra.mxu0 %v235
    %1357 = vmatprep.subr.mxu0 0.0
    %1358 = vmatpush1.msra.mxu0 %v236
    %1359 = vmatprep.subr.mxu0 0.0
    %1360 = vmatpush1.msra.mxu0 %v237
    %1361 = vmatprep.subr.mxu0 0.0
    %1362 = vmatpush1.msra.mxu0 %v238
    %1363 = vmatprep.subr.mxu0 0.0
    %1364 = vmatpush1.msra.mxu0 %v239
    %1365 = vmatprep.subr.mxu0 0.0
    %1366 = vmatpush1.msra.mxu0 %v240
    %1367 = vmatprep.subr.mxu0 0.0
    %1368 = vmatpush1.msra.mxu0 %v241
    %1369 = vmatprep.subr.mxu0 0.0
    %1370 = vmatpush1.msra.mxu0 %v242
    %1371 = vmatprep.subr.mxu0 0.0
    %1372 = vmatpush1.msra.mxu0 %v243
    %1373 = vmatprep.subr.mxu0 0.0
    %1374 = vmatpush1.msra.mxu0 %v244
    %1375 = vmatprep.subr.mxu0 0.0
    %1376 = vmatpush1.msra.mxu0 %v245
    %1377 = vmatprep.subr.mxu0 0.0
    %1378 = vmatpush1.msra.mxu0 %v246
    %1379 = vmatprep.subr.mxu0 0.0
    %1380 = vmatpush1.msra.mxu0 %v247
    %1381 = vmatprep.subr.mxu0 0.0
    %1382 = vmatpush1.msra.mxu0 0.0
    %1383 = vmatprep.subr.mxu0 0.0
    %1384 = vmatpush1.msra.mxu0 0.0
    %1385 = vmatprep.subr.mxu0 0.0
    %1386 = vmatpush1.msra.mxu0 0.0
    %1387 = vmatprep.subr.mxu0 0.0
    %1388 = vmatpush1.msra.mxu0 0.0
    %1389 = vmatprep.subr.mxu0 0.0
    %1390 = vmatpush1.msra.mxu0 0.0
    %1391 = vmatprep.subr.mxu0 0.0
    %1392 = vmatpush1.msra.mxu0 0.0
    %1393 = vmatprep.subr.mxu0 0.0
    %1394 = vmatpush1.msra.mxu0 0.0
    %1395 = vmatprep.subr.mxu0 0.0
    %1396 = vmatpush1.msra.mxu0 0.0
    %1397 = vmatprep.subr.mxu0 0.0
    %1398 = vmatpush1.msra.mxu0 0.0
    %1399 = vmatprep.subr.mxu0 0.0
    %1400 = vmatpush1.msra.mxu0 0.0
    %1401 = vmatprep.subr.mxu0 0.0
    %1402 = vmatpush1.msra.mxu0 0.0
    %1403 = vmatprep.subr.mxu0 0.0
    %1404 = vmatpush1.msra.mxu0 0.0
    %1405 = vmatprep.subr.mxu0 0.0
    %1406 = vmatpush1.msra.mxu0 0.0
    %1407 = vmatprep.subr.mxu0 0.0
    %1408 = vmatpush1.msra.mxu0 0.0
    %1409 = vmatprep.subr.mxu0 0.0
    %1410 = vmatpush1.msra.mxu0 0.0
    %1411 = vmatprep.subr.mxu0 0.0
    %1412 = vmatpush1.msra.mxu0 0.0
    %1413 = vmatprep.mubr.f32.mxu0 0.0
    %1414 = vmatmul.mubr.f32.gmra.mrb[0].mxu0 %v1348
    %v1415 = vpop.f32.mrb[0].mxu0
    %v1416 = vadd.f32 %v1274, %v1415
    %v1417 = vpop.f32.mrb[0].mxu0
    %1418 = vdwg.mxu0
    %v1419 = vadd.f32 %v1416, %v229
    %v1420 = vtanh.pop %v1419
    %1421 = vmatprep.subr.mxu0 0.0
    %1422 = vmatpush1.msra.mxu0 %v319
    %1423 = vmatprep.subr.mxu0 0.0
    %1424 = vmatpush1.msra.mxu0 %v320
    %1425 = vmatprep.subr.mxu0 0.0
    %1426 = vmatpush1.msra.mxu0 %v321
    %1427 = vmatprep.subr.mxu0 0.0
    %1428 = vmatpush1.msra.mxu0 %v322
    %1429 = vmatprep.subr.mxu0 0.0
    %1430 = vmatpush1.msra.mxu0 %v323
    %1431 = vmatprep.subr.mxu0 0.0
    %1432 = vmatpush1.msra.mxu0 %v324
    %1433 = vmatprep.subr.mxu0 0.0
    %1434 = vmatpush1.msra.mxu0 %v325
    %1435 = vmatprep.subr.mxu0 0.0
    %1436 = vmatpush1.msra.mxu0 %v326
    %1437 = vmatprep.subr.mxu0 0.0
    %1438 = vmatpush1.msra.mxu0 %v327
    %1439 = vmatprep.subr.mxu0 0.0
    %1440 = vmatpush1.msra.mxu0 %v328
    %1441 = vmatprep.subr.mxu0 0.0
    %1442 = vmatpush1.msra.mxu0 %v329
    %1443 = vmatprep.subr.mxu0 0.0
    %1444 = vmatpush1.msra.mxu0 %v330
    %1445 = vmatprep.subr.mxu0 0.0
    %1446 = vmatpush1.msra.mxu0 %v331
    %1447 = vmatprep.subr.mxu0 0.0
    %1448 = vmatpush1.msra.mxu0 %v332
    %1449 = vmatprep.subr.mxu0 0.0
    %1450 = vmatpush1.msra.mxu0 %v333
    %1451 = vmatprep.subr.mxu0 0.0
    %1452 = vmatpush1.msra.mxu0 %v334
    %1453 = vmatprep.subr.mxu0 0.0
    %1454 = vmatpush1.msra.mxu0 0.0
    %1455 = vmatprep.subr.mxu0 0.0
    %1456 = vmatpush1.msra.mxu0 0.0
    %1457 = vmatprep.subr.mxu0 0.0
    %1458 = vmatpush1.msra.mxu0 0.0
    %1459 = vmatprep.subr.mxu0 0.0
    %1460 = vmatpush1.msra.mxu0 0.0
    %1461 = vmatprep.subr.mxu0 0.0
    %1462 = vmatpush1.msra.mxu0 0.0
    %1463 = vmatprep.subr.mxu0 0.0
    %1464 = vmatpush1.msra.mxu0 0.0
    %1465 = vmatprep.subr.mxu0 0.0
    %1466 = vmatpush1.msra.mxu0 0.0
    %1467 = vmatprep.subr.mxu0 0.0
    %1468 = vmatpush1.msra.mxu0 0.0
    %1469 = vmatprep.subr.mxu0 0.0
    %1470 = vmatpush1.msra.mxu0 0.0
    %1471 = vmatprep.subr.mxu0 0.0
    %1472 = vmatpush1.msra.mxu0 0.0
    %1473 = vmatprep.subr.mxu0 0.0
    %1474 = vmatpush1.msra.mxu0 0.0
    %1475 = vmatprep.subr.mxu0 0.0
    %1476 = vmatpush1.msra.mxu0 0.0
    %1477 = vmatprep.subr.mxu0 0.0
    %1478 = vmatpush1.msra.mxu0 0.0
    %1479 = vmatprep.subr.mxu0 0.0
    %1480 = vmatpush1.msra.mxu0 0.0
    %1481 = vmatprep.subr.mxu0 0.0
    %1482 = vmatpush1.msra.mxu0 0.0
    %1483 = vmatprep.subr.mxu0 0.0
    %1484 = vmatpush1.msra.mxu0 0.0
    %1485 = vmatprep.mubr.f32.mxu0 0.0
    %1486 = vmatmul.mubr.f32.gmra.mrb[0].mxu0 %v1420
    %v1487 = vpop.f32.mrb[0].mxu0
    %v1488 = vadd.f32 0.0, %v1487
    %v1489 = vpop.f32.mrb[0].mxu0
    %1490 = vdwg.mxu0
    %1491 = vmatprep.subr.mxu0 0.0
    %1492 = vmatpush1.msra.mxu0 %v405
    %1493 = vmatprep.subr.mxu0 0.0
    %1494 = vmatpush1.msra.mxu0 %v406
    %1495 = vmatprep.subr.mxu0 0.0
    %1496 = vmatpush1.msra.mxu0 %v407
    %1497 = vmatprep.subr.mxu0 0.0
    %1498 = vmatpush1.msra.mxu0 %v408
    %1499 = vmatprep.subr.mxu0 0.0
    %1500 = vmatpush1.msra.mxu0 %v409
    %1501 = vmatprep.subr.mxu0 0.0
    %1502 = vmatpush1.msra.mxu0 %v410
    %1503 = vmatprep.subr.mxu0 0.0
    %1504 = vmatpush1.msra.mxu0 %v411
    %1505 = vmatprep.subr.mxu0 0.0
    %1506 = vmatpush1.msra.mxu0 %v412
    %1507 = vmatprep.subr.mxu0 0.0
    %1508 = vmatpush1.msra.mxu0 %v413
    %1509 = vmatprep.subr.mxu0 0.0
    %1510 = vmatpush1.msra.mxu0 %v414
    %1511 = vmatprep.subr.mxu0 0.0
    %1512 = vmatpush1.msra.mxu0 %v415
    %1513 = vmatprep.subr.mxu0 0.0
    %1514 = vmatpush1.msra.mxu0 %v416
    %1515 = vmatprep.subr.mxu0 0.0
    %1516 = vmatpush1.msra.mxu0 %v417
    %1517 = vmatprep.subr.mxu0 0.0
    %1518 = vmatpush1.msra.mxu0 %v418
    %1519 = vmatprep.subr.mxu0 0.0
    %1520 = vmatpush1.msra.mxu0 %v419
    %1521 = vmatprep.subr.mxu0 0.0
    %1522 = vmatpush1.msra.mxu0 %v420
    %1523 = vmatprep.subr.mxu0 0.0
    %1524 = vmatpush1.msra.mxu0 0.0
    %1525 = vmatprep.subr.mxu0 0.0
    %1526 = vmatpush1.msra.mxu0 0.0
    %1527 = vmatprep.subr.mxu0 0.0
    %1528 = vmatpush1.msra.mxu0 0.0
    %1529 = vmatprep.subr.mxu0 0.0
    %1530 = vmatpush1.msra.mxu0 0.0
    %1531 = vmatprep.subr.mxu0 0.0
    %1532 = vmatpush1.msra.mxu0 0.0
    %1533 = vmatprep.subr.mxu0 0.0
    %1534 = vmatpush1.msra.mxu0 0.0
    %1535 = vmatprep.subr.mxu0 0.0
    %1536 = vmatpush1.msra.mxu0 0.0
    %1537 = vmatprep.subr.mxu0 0.0
    %1538 = vmatpush1.msra.mxu0 0.0
    %1539 = vmatprep.subr.mxu0 0.0
    %1540 = vmatpush1.msra.mxu0 0.0
    %1541 = vmatprep.subr.mxu0 0.0
    %1542 = vmatpush1.msra.mxu0 0.0
    %1543 = vmatprep.subr.mxu0 0.0
    %1544 = vmatpush1.msra.mxu0 0.0
    %1545 = vmatprep.subr.mxu0 0.0
    %1546 = vmatpush1.msra.mxu0 0.0
    %1547 = vmatprep.subr.mxu0 0.0
    %1548 = vmatpush1.msra.mxu0 0.0
    %1549 = vmatprep.subr.mxu0 0.0
    %1550 = vmatpush1.msra.mxu0 0.0
    %1551 = vmatprep.subr.mxu0 0.0
    %1552 = vmatpush1.msra.mxu0 0.0
    %1553 = vmatprep.subr.mxu0 0.0
    %1554 = vmatpush1.msra.mxu0 0.0
    %1555 = vmatprep.mubr.f32.mxu0 0.0
    %1556 = vmatmul.mubr.f32.gmra.mrb[0].mxu0 %v1348
    %v1557 = vpop.f32.mrb[0].mxu0
    %v1558 = vadd.f32 0.0, %v1557
    %v1559 = vpop.f32.mrb[0].mxu0
    %1560 = vdwg.mxu0
    %v1561 = vadd.f32 %v216, %v1558
    %v1562 = vtanh.pop %v1561
    %1563 = vmatprep.subr.mxu0 0.0
    %1564 = vmatpush1.msra.mxu0 %v232
    %1565 = vmatprep.subr.mxu0 0.0
    %1566 = vmatpush1.msra.mxu0 %v233
    %1567 = vmatprep.subr.mxu0 0.0
    %1568 = vmatpush1.msra.mxu0 %v234
    %1569 = vmatprep.subr.mxu0 0.0
    %1570 = vmatpush1.msra.mxu0 %v235
    %1571 = vmatprep.subr.mxu0 0.0
    %1572 = vmatpush1.msra.mxu0 %v236
    %1573 = vmatprep.subr.mxu0 0.0
    %1574 = vmatpush1.msra.mxu0 %v237
    %1575 = vmatprep.subr.mxu0 0.0
    %1576 = vmatpush1.msra.mxu0 %v238
    %1577 = vmatprep.subr.mxu0 0.0
    %1578 = vmatpush1.msra.mxu0 %v239
    %1579 = vmatprep.subr.mxu0 0.0
    %1580 = vmatpush1.msra.mxu0 %v240
    %1581 = vmatprep.subr.mxu0 0.0
    %1582 = vmatpush1.msra.mxu0 %v241
    %1583 = vmatprep.subr.mxu0 0.0
    %1584 = vmatpush1.msra.mxu0 %v242
    %1585 = vmatprep.subr.mxu0 0.0
    %1586 = vmatpush1.msra.mxu0 %v243
    %1587 = vmatprep.subr.mxu0 0.0
    %1588 = vmatpush1.msra.mxu0 %v244
    %1589 = vmatprep.subr.mxu0 0.0
    %1590 = vmatpush1.msra.mxu0 %v245
    %1591 = vmatprep.subr.mxu0 0.0
    %1592 = vmatpush1.msra.mxu0 %v246
    %1593 = vmatprep.subr.mxu0 0.0
    %1594 = vmatpush1.msra.mxu0 %v247
    %1595 = vmatprep.subr.mxu0 0.0
    %1596 = vmatpush1.msra.mxu0 0.0
    %1597 = vmatprep.subr.mxu0 0.0
    %1598 = vmatpush1.msra.mxu0 0.0
    %1599 = vmatprep.subr.mxu0 0.0
    %1600 = vmatpush1.msra.mxu0 0.0
    %1601 = vmatprep.subr.mxu0 0.0
    %1602 = vmatpush1.msra.mxu0 0.0
    %1603 = vmatprep.subr.mxu0 0.0
    %1604 = vmatpush1.msra.mxu0 0.0
    %1605 = vmatprep.subr.mxu0 0.0
    %1606 = vmatpush1.msra.mxu0 0.0
    %1607 = vmatprep.subr.mxu0 0.0
    %1608 = vmatpush1.msra.mxu0 0.0
    %1609 = vmatprep.subr.mxu0 0.0
    %1610 = vmatpush1.msra.mxu0 0.0
    %1611 = vmatprep.subr.mxu0 0.0
    %1612 = vmatpush1.msra.mxu0 0.0
    %1613 = vmatprep.subr.mxu0 0.0
    %1614 = vmatpush1.msra.mxu0 0.0
    %1615 = vmatprep.subr.mxu0 0.0
    %1616 = vmatpush1.msra.mxu0 0.0
    %1617 = vmatprep.subr.mxu0 0.0
    %1618 = vmatpush1.msra.mxu0 0.0
    %1619 = vmatprep.subr.mxu0 0.0
    %1620 = vmatpush1.msra.mxu0 0.0
    %1621 = vmatprep.subr.mxu0 0.0
    %1622 = vmatpush1.msra.mxu0 0.0
    %1623 = vmatprep.subr.mxu0 0.0
    %1624 = vmatpush1.msra.mxu0 0.0
    %1625 = vmatprep.subr.mxu0 0.0
    %1626 = vmatpush1.msra.mxu0 0.0
    %1627 = vmatprep.mubr.f32.mxu0 0.0
    %1628 = vmatmul.mubr.f32.gmra.mrb[0].mxu0 %v1562
    %v1629 = vpop.f32.mrb[0].mxu0
    %v1630 = vadd.f32 %v1488, %v1629
    %v1631 = vpop.f32.mrb[0].mxu0
    %1632 = vdwg.mxu0
    %v1633 = vadd.f32 %v1630, %v229
    %v1634 = vtanh.pop %v1633
    %1635 = vmatprep.subr.mxu0 0.0
    %1636 = vmatpush1.msra.mxu0 %v319
    %1637 = vmatprep.subr.mxu0 0.0
    %1638 = vmatpush1.msra.mxu0 %v320
    %1639 = vmatprep.subr.mxu0 0.0
    %1640 = vmatpush1.msra.mxu0 %v321
    %1641 = vmatprep.subr.mxu0 0.0
    %1642 = vmatpush1.msra.mxu0 %v322
    %1643 = vmatprep.subr.mxu0 0.0
    %1644 = vmatpush1.msra.mxu0 %v323
    %1645 = vmatprep.subr.mxu0 0.0
    %1646 = vmatpush1.msra.mxu0 %v324
    %1647 = vmatprep.subr.mxu0 0.0
    %1648 = vmatpush1.msra.mxu0 %v325
    %1649 = vmatprep.subr.mxu0 0.0
    %1650 = vmatpush1.msra.mxu0 %v326
    %1651 = vmatprep.subr.mxu0 0.0
    %1652 = vmatpush1.msra.mxu0 %v327
    %1653 = vmatprep.subr.mxu0 0.0
    %1654 = vmatpush1.msra.mxu0 %v328
    %1655 = vmatprep.subr.mxu0 0.0
    %1656 = vmatpush1.msra.mxu0 %v329
    %1657 = vmatprep.subr.mxu0 0.0
    %1658 = vmatpush1.msra.mxu0 %v330
    %1659 = vmatprep.subr.mxu0 0.0
    %1660 = vmatpush1.msra.mxu0 %v331
    %1661 = vmatprep.subr.mxu0 0.0
    %1662 = vmatpush1.msra.mxu0 %v332
    %1663 = vmatprep.subr.mxu0 0.0
    %1664 = vmatpush1.msra.mxu0 %v333
    %1665 = vmatprep.subr.mxu0 0.0
    %1666 = vmatpush1.msra.mxu0 %v334
    %1667 = vmatprep.subr.mxu0 0.0
    %1668 = vmatpush1.msra.mxu0 0.0
    %1669 = vmatprep.subr.mxu0 0.0
    %1670 = vmatpush1.msra.mxu0 0.0
    %1671 = vmatprep.subr.mxu0 0.0
    %1672 = vmatpush1.msra.mxu0 0.0
    %1673 = vmatprep.subr.mxu0 0.0
    %1674 = vmatpush1.msra.mxu0 0.0
    %1675 = vmatprep.subr.mxu0 0.0
    %1676 = vmatpush1.msra.mxu0 0.0
    %1677 = vmatprep.subr.mxu0 0.0
    %1678 = vmatpush1.msra.mxu0 0.0
    %1679 = vmatprep.subr.mxu0 0.0
    %1680 = vmatpush1.msra.mxu0 0.0
    %1681 = vmatprep.subr.mxu0 0.0
    %1682 = vmatpush1.msra.mxu0 0.0
    %1683 = vmatprep.subr.mxu0 0.0
    %1684 = vmatpush1.msra.mxu0 0.0
    %1685 = vmatprep.subr.mxu0 0.0
    %1686 = vmatpush1.msra.mxu0 0.0
    %1687 = vmatprep.subr.mxu0 0.0
    %1688 = vmatpush1.msra.mxu0 0.0
    %1689 = vmatprep.subr.mxu0 0.0
    %1690 = vmatpush1.msra.mxu0 0.0
    %1691 = vmatprep.subr.mxu0 0.0
    %1692 = vmatpush1.msra.mxu0 0.0
    %1693 = vmatprep.subr.mxu0 0.0
    %1694 = vmatpush1.msra.mxu0 0.0
    %1695 = vmatprep.subr.mxu0 0.0
    %1696 = vmatpush1.msra.mxu0 0.0
    %1697 = vmatprep.subr.mxu0 0.0
    %1698 = vmatpush1.msra.mxu0 0.0
    %1699 = vmatprep.mubr.f32.mxu0 0.0
    %1700 = vmatmul.mubr.f32.gmra.mrb[0].mxu0 %v1634
    %v1701 = vpop.f32.mrb[0].mxu0
    %v1702 = vadd.f32 0.0, %v1701
    %v1703 = vpop.f32.mrb[0].mxu0
    %1704 = vdwg.mxu0
    %1705 = vmatprep.subr.mxu0 0.0
    %1706 = vmatpush1.msra.mxu0 %v405
    %1707 = vmatprep.subr.mxu0 0.0
    %1708 = vmatpush1.msra.mxu0 %v406
    %1709 = vmatprep.subr.mxu0 0.0
    %1710 = vmatpush1.msra.mxu0 %v407
    %1711 = vmatprep.subr.mxu0 0.0
    %1712 = vmatpush1.msra.mxu0 %v408
    %1713 = vmatprep.subr.mxu0 0.0
    %1714 = vmatpush1.msra.mxu0 %v409
    %1715 = vmatprep.subr.mxu0 0.0
    %1716 = vmatpush1.msra.mxu0 %v410
    %1717 = vmatprep.subr.mxu0 0.0
    %1718 = vmatpush1.msra.mxu0 %v411
    %1719 = vmatprep.subr.mxu0 0.0
    %1720 = vmatpush1.msra.mxu0 %v412
    %1721 = vmatprep.subr.mxu0 0.0
    %1722 = vmatpush1.msra.mxu0 %v413
    %1723 = vmatprep.subr.mxu0 0.0
    %1724 = vmatpush1.msra.mxu0 %v414
    %1725 = vmatprep.subr.mxu0 0.0
    %1726 = vmatpush1.msra.mxu0 %v415
    %1727 = vmatprep.subr.mxu0 0.0
    %1728 = vmatpush1.msra.mxu0 %v416
    %1729 = vmatprep.subr.mxu0 0.0
    %1730 = vmatpush1.msra.mxu0 %v417
    %1731 = vmatprep.subr.mxu0 0.0
    %1732 = vmatpush1.msra.mxu0 %v418
    %1733 = vmatprep.subr.mxu0 0.0
    %1734 = vmatpush1.msra.mxu0 %v419
    %1735 = vmatprep.subr.mxu0 0.0
    %1736 = vmatpush1.msra.mxu0 %v420
    %1737 = vmatprep.subr.mxu0 0.0
    %1738 = vmatpush1.msra.mxu0 0.0
    %1739 = vmatprep.subr.mxu0 0.0
    %1740 = vmatpush1.msra.mxu0 0.0
    %1741 = vmatprep.subr.mxu0 0.0
    %1742 = vmatpush1.msra.mxu0 0.0
    %1743 = vmatprep.subr.mxu0 0.0
    %1744 = vmatpush1.msra.mxu0 0.0
    %1745 = vmatprep.subr.mxu0 0.0
    %1746 = vmatpush1.msra.mxu0 0.0
    %1747 = vmatprep.subr.mxu0 0.0
    %1748 = vmatpush1.msra.mxu0 0.0
    %1749 = vmatprep.subr.mxu0 0.0
    %1750 = vmatpush1.msra.mxu0 0.0
    %1751 = vmatprep.subr.mxu0 0.0
    %1752 = vmatpush1.msra.mxu0 0.0
    %1753 = vmatprep.subr.mxu0 0.0
    %1754 = vmatpush1.msra.mxu0 0.0
    %1755 = vmatprep.subr.mxu0 0.0
    %1756 = vmatpush1.msra.mxu0 0.0
    %1757 = vmatprep.subr.mxu0 0.0
    %1758 = vmatpush1.msra.mxu0 0.0
    %1759 = vmatprep.subr.mxu0 0.0
    %1760 = vmatpush1.msra.mxu0 0.0
    %1761 = vmatprep.subr.mxu0 0.0
    %1762 = vmatpush1.msra.mxu0 0.0
    %1763 = vmatprep.subr.mxu0 0.0
    %1764 = vmatpush1.msra.mxu0 0.0
    %1765 = vmatprep.subr.mxu0 0.0
    %1766 = vmatpush1.msra.mxu0 0.0
    %1767 = vmatprep.subr.mxu0 0.0
    %1768 = vmatpush1.msra.mxu0 0.0
    %1769 = vmatprep.mubr.f32.mxu0 0.0
    %1770 = vmatmul.mubr.f32.gmra.mrb[0].mxu0 %v1562
    %v1771 = vpop.f32.mrb[0].mxu0
    %v1772 = vadd.f32 0.0, %v1771
    %v1773 = vpop.f32.mrb[0].mxu0
    %1774 = vdwg.mxu0
    %v1775 = vadd.f32 %v221, %v1772
    %v1776 = vtanh.pop %v1775
    %1777 = vmatprep.subr.mxu0 0.0
    %1778 = vmatpush1.msra.mxu0 %v232
    %1779 = vmatprep.subr.mxu0 0.0
    %1780 = vmatpush1.msra.mxu0 %v233
    %1781 = vmatprep.subr.mxu0 0.0
    %1782 = vmatpush1.msra.mxu0 %v234
    %1783 = vmatprep.subr.mxu0 0.0
    %1784 = vmatpush1.msra.mxu0 %v235
    %1785 = vmatprep.subr.mxu0 0.0
    %1786 = vmatpush1.msra.mxu0 %v236
    %1787 = vmatprep.subr.mxu0 0.0
    %1788 = vmatpush1.msra.mxu0 %v237
    %1789 = vmatprep.subr.mxu0 0.0
    %1790 = vmatpush1.msra.mxu0 %v238
    %1791 = vmatprep.subr.mxu0 0.0
    %1792 = vmatpush1.msra.mxu0 %v239
    %1793 = vmatprep.subr.mxu0 0.0
    %1794 = vmatpush1.msra.mxu0 %v240
    %1795 = vmatprep.subr.mxu0 0.0
    %1796 = vmatpush1.msra.mxu0 %v241
    %1797 = vmatprep.subr.mxu0 0.0
    %1798 = vmatpush1.msra.mxu0 %v242
    %1799 = vmatprep.subr.mxu0 0.0
    %1800 = vmatpush1.msra.mxu0 %v243
    %1801 = vmatprep.subr.mxu0 0.0
    %1802 = vmatpush1.msra.mxu0 %v244
    %1803 = vmatprep.subr.mxu0 0.0
    %1804 = vmatpush1.msra.mxu0 %v245
    %1805 = vmatprep.subr.mxu0 0.0
    %1806 = vmatpush1.msra.mxu0 %v246
    %1807 = vmatprep.subr.mxu0 0.0
    %1808 = vmatpush1.msra.mxu0 %v247
    %1809 = vmatprep.subr.mxu0 0.0
    %1810 = vmatpush1.msra.mxu0 0.0
    %1811 = vmatprep.subr.mxu0 0.0
    %1812 = vmatpush1.msra.mxu0 0.0
    %1813 = vmatprep.subr.mxu0 0.0
    %1814 = vmatpush1.msra.mxu0 0.0
    %1815 = vmatprep.subr.mxu0 0.0
    %1816 = vmatpush1.msra.mxu0 0.0
    %1817 = vmatprep.subr.mxu0 0.0
    %1818 = vmatpush1.msra.mxu0 0.0
    %1819 = vmatprep.subr.mxu0 0.0
    %1820 = vmatpush1.msra.mxu0 0.0
    %1821 = vmatprep.subr.mxu0 0.0
    %1822 = vmatpush1.msra.mxu0 0.0
    %1823 = vmatprep.subr.mxu0 0.0
    %1824 = vmatpush1.msra.mxu0 0.0
    %1825 = vmatprep.subr.mxu0 0.0
    %1826 = vmatpush1.msra.mxu0 0.0
    %1827 = vmatprep.subr.mxu0 0.0
    %1828 = vmatpush1.msra.mxu0 0.0
    %1829 = vmatprep.subr.mxu0 0.0
    %1830 = vmatpush1.msra.mxu0 0.0
    %1831 = vmatprep.subr.mxu0 0.0
    %1832 = vmatpush1.msra.mxu0 0.0
    %1833 = vmatprep.subr.mxu0 0.0
    %1834 = vmatpush1.msra.mxu0 0.0
    %1835 = vmatprep.subr.mxu0 0.0
    %1836 = vmatpush1.msra.mxu0 0.0
    %1837 = vmatprep.subr.mxu0 0.0
    %1838 = vmatpush1.msra.mxu0 0.0
    %1839 = vmatprep.subr.mxu0 0.0
    %1840 = vmatpush1.msra.mxu0 0.0
    %1841 = vmatprep.mubr.f32.mxu0 0.0
    %1842 = vmatmul.mubr.f32.gmra.mrb[0].mxu0 %v1776
    %v1843 = vpop.f32.mrb[0].mxu0
    %v1844 = vadd.f32 %v1702, %v1843
    %v1845 = vpop.f32.mrb[0].mxu0
    %1846 = vdwg.mxu0
    %v1847 = vadd.f32 %v1844, %v229
    %v1848 = vtanh.pop %v1847
    %v1849 = vmax.f32 %v1848, 0.0
    %v1850 = vld [vmem:[%s7] sm:$0xff]
    %v1851 = vld [vmem:[%s7 + $0x8] sm:$0xff]
    %v1852 = vld [vmem:[%s7 + $0x10] sm:$0xff]
    %v1853 = vld [vmem:[%s7 + $0x18] sm:$0xff]
    %v1854 = vld [vmem:[%s7 + $0x20] sm:$0xff]
    %v1855 = vld [vmem:[%s7 + $0x28] sm:$0xff]
    %v1856 = vld [vmem:[%s7 + $0x30] sm:$0xff]
    %v1857 = vld [vmem:[%s7 + $0x38] sm:$0xff]
    %v1858 = vld [vmem:[%s7 + $0x40] sm:$0xff]
    %v1859 = vld [vmem:[%s7 + $0x48] sm:$0xff]
    %v1860 = vld [vmem:[%s7 + $0x50] sm:$0xff]
    %v1861 = vld [vmem:[%s7 + $0x58] sm:$0xff]
    %v1862 = vld [vmem:[%s7 + $0x60] sm:$0xff]
    %v1863 = vld [vmem:[%s7 + $0x68] sm:$0xff]
    %v1864 = vld [vmem:[%s7 + $0x70] sm:$0xff]
    %v1865 = vld [vmem:[%s7 + $0x78] sm:$0xff]
    %v1866 = vld [vmem:[#allocation6] sm:$0x1]
    %v1868 = vlaneseq
    %v1869 = vshrl.u32 %v1868, 7
    %v1870 = vsub.s32 0, %v1869
    %v1871 = vrot.slane %v1866, %v1870
    %1873 = vmatprep.subr.mxu0 0.0
    %1874 = vmatpush1.msra.mxu0 %v1850
    %1875 = vmatprep.subr.mxu0 0.0
    %1876 = vmatpush1.msra.mxu0 %v1851
    %1877 = vmatprep.subr.mxu0 0.0
    %1878 = vmatpush1.msra.mxu0 %v1852
    %1879 = vmatprep.subr.mxu0 0.0
    %1880 = vmatpush1.msra.mxu0 %v1853
    %1881 = vmatprep.subr.mxu0 0.0
    %1882 = vmatpush1.msra.mxu0 %v1854
    %1883 = vmatprep.subr.mxu0 0.0
    %1884 = vmatpush1.msra.mxu0 %v1855
    %1885 = vmatprep.subr.mxu0 0.0
    %1886 = vmatpush1.msra.mxu0 %v1856
    %1887 = vmatprep.subr.mxu0 0.0
    %1888 = vmatpush1.msra.mxu0 %v1857
    %1889 = vmatprep.subr.mxu0 0.0
    %1890 = vmatpush1.msra.mxu0 %v1858
    %1891 = vmatprep.subr.mxu0 0.0
    %1892 = vmatpush1.msra.mxu0 %v1859
    %1893 = vmatprep.subr.mxu0 0.0
    %1894 = vmatpush1.msra.mxu0 %v1860
    %1895 = vmatprep.subr.mxu0 0.0
    %1896 = vmatpush1.msra.mxu0 %v1861
    %1897 = vmatprep.subr.mxu0 0.0
    %1898 = vmatpush1.msra.mxu0 %v1862
    %1899 = vmatprep.subr.mxu0 0.0
    %1900 = vmatpush1.msra.mxu0 %v1863
    %1901 = vmatprep.subr.mxu0 0.0
    %1902 = vmatpush1.msra.mxu0 %v1864
    %1903 = vmatprep.subr.mxu0 0.0
    %1904 = vmatpush1.msra.mxu0 %v1865
    %1905 = vmatprep.subr.mxu0 0.0
    %1906 = vmatpush1.msra.mxu0 0.0
    %1907 = vmatprep.subr.mxu0 0.0
    %1908 = vmatpush1.msra.mxu0 0.0
    %1909 = vmatprep.subr.mxu0 0.0
    %1910 = vmatpush1.msra.mxu0 0.0
    %1911 = vmatprep.subr.mxu0 0.0
    %1912 = vmatpush1.msra.mxu0 0.0
    %1913 = vmatprep.subr.mxu0 0.0
    %1914 = vmatpush1.msra.mxu0 0.0
    %1915 = vmatprep.subr.mxu0 0.0
    %1916 = vmatpush1.msra.mxu0 0.0
    %1917 = vmatprep.subr.mxu0 0.0
    %1918 = vmatpush1.msra.mxu0 0.0
    %1919 = vmatprep.subr.mxu0 0.0
    %1920 = vmatpush1.msra.mxu0 0.0
    %1921 = vmatprep.subr.mxu0 0.0
    %1922 = vmatpush1.msra.mxu0 0.0
    %1923 = vmatprep.subr.mxu0 0.0
    %1924 = vmatpush1.msra.mxu0 0.0
    %1925 = vmatprep.subr.mxu0 0.0
    %1926 = vmatpush1.msra.mxu0 0.0
    %1927 = vmatprep.subr.mxu0 0.0
    %1928 = vmatpush1.msra.mxu0 0.0
    %1929 = vmatprep.subr.mxu0 0.0
    %1930 = vmatpush1.msra.mxu0 0.0
    %1931 = vmatprep.subr.mxu0 0.0
    %1932 = vmatpush1.msra.mxu0 0.0
    %1933 = vmatprep.subr.mxu0 0.0
    %1934 = vmatpush1.msra.mxu0 0.0
    %1935 = vmatprep.subr.mxu0 0.0
    %1936 = vmatpush1.msra.mxu0 0.0
    %1937 = vmatprep.mubr.f32.mxu0 0.0
    %1938 = vmatmul.mubr.f32.gmra.mrb[0].mxu0 %v1849
    %v1939 = vpop.f32.mrb[0].mxu0
    %v1940 = vadd.f32 %v1871, %v1939
    %v1941 = vpop.f32.mrb[0].mxu0
    %1942 = vdwg.mxu0
    %v1943 = vxor.u32 %v1940, 2147483648
    %v1944 = vmul.f32 %v1943, 1.442695
    %v1945 = vpow.pop %v1944
    %v1946 = vadd.f32 %v1945, 1.0
    %v1947 = vrcp.pop %v1946
    %v1948 = vmul.f32 1.0, %v1947
    %vm1949 = vcmask 80896
    %1950 = vst.msk [vmem:[%s9] sm:$0xff] %vm1949, %v1948
    // Predicated region
    $region50: #{rnn_forward.1} parent=1 // pred_check
      _
    $region51: #{rnn_forward.1} parent=1 // pred_check_branch
      %1952 = sbr.rel (0) target = $region53
    $region52: #{rnn_forward.1} parent=1 // pred_region
      _
    $region53: #{rnn_forward.1} parent=1 // pred_fallthru
      _
    // Predicated region
    $region54: #{rnn_forward.1} parent=1 // pred_check
      _
    $region55: #{rnn_forward.1} parent=1 // pred_check_branch
      %1954 = sbr.rel (0) target = $region57
    $region56: #{rnn_forward.1} parent=1 // pred_region
      _
    $region57: #{rnn_forward.1} parent=1 // pred_fallthru
      _
    %1955 = vsyncpa [#allocation3], 1
    %1956 = vsyncpa [#allocation5], 1

</llo_original>
